<compile_context>
chip_gen: v7x
topology: tpu7x:2x2x1
jax: 0.10.0
libtpu: 0.0.40
codegen_flags: <defaults>
</compile_context>

<pallas_src>
import functools

import jax
import jax.numpy as jnp
from jax import lax
from jax.experimental import pallas as pl
from jax.experimental.pallas import tpu as pltpu


def _round_up(x, m):
    return ((x + m - 1) // m) * m


def _lstm_classifier_kernel(x_ref, wih_ref, whh_ref, b_ref, wcls_ref, bcls_ref,
                            out_ref, *, seq_len):
    """One batch block of: LSTM over time (-> c_n) -> Linear -> softmax.

    x_ref    : (L*bn, D)   time-major rows for this batch block (row = t*bn + n), bf16
    wih_ref  : (D, 4*Hp)   bf16, gate-column order [i, f, o, g], each block H->Hp padded
    whh_ref  : (Hp, 4*Hp)  bf16, same layout; padded rows / columns are zero
    b_ref    : (1, 4*Hp)   f32  (b_ih + b_hh, permuted / zero-padded)
    wcls_ref : (Hp, Cp)    bf16 (padded rows / class columns are zero)
    bcls_ref : (1, Cp)     f32  (padded class lanes biased to -1e9)
    out_ref  : (bn, Cp)    f32 softmax probabilities
    """
    LB, _ = x_ref.shape
    bn = LB // seq_len
    Hp4 = whh_ref.shape[1]
    Hp = Hp4 // 4
    Hp3 = 3 * Hp

    # --- Prologue: hoisted input projection, ONE MXU matmul, bias folded in.
    # Kept as a register-resident bf16 value -> no VMEM scratch store/reload.
    xw = (jnp.dot(x_ref[...], wih_ref[...], preferred_element_type=jnp.float32)
          + b_ref[...]).astype(jnp.bfloat16)                  # (L*bn, 4*Hp)

    whh = whh_ref[...]                                        # hoisted once (bf16)

    # h carried in bf16 (MXU operand only); c and all element-wise math in f32.
    h = jnp.zeros((bn, Hp), whh.dtype)
    c = jnp.zeros((bn, Hp), jnp.float32)

    # --- Serial recurrence, fully unrolled with static indices (L is small here).
    # Only h @ W_hh sits on the per-step critical path.
    for t in range(seq_len):
        gates = (xw[t * bn:(t + 1) * bn]                      # static, sublane-aligned
                 + jnp.dot(h, whh, preferred_element_type=jnp.float32))   # (bn, 4*Hp) f32
        # Hp is a multiple of 128, so every gate slice is a whole lane tile: the
        # slices below are free views, no cross-lane relayouts on the serial chain.
        sig = jax.nn.sigmoid(gates[:, :Hp3])                  # i, f, o in one EUP pass
        g_g = jnp.tanh(gates[:, Hp3:])                        # g in one EUP pass
        i_g = sig[:, :Hp]
        f_g = sig[:, Hp:2 * Hp]
        o_g = sig[:, 2 * Hp:]
        c = f_g * c + i_g * g_g
        h = (o_g * jnp.tanh(c)).astype(whh.dtype)             # bf16 carry

    # --- Classifier head on the final cell state (num_layers=1 -> c_n.reshape(-1, H))
    # + numerically-stable softmax with an EXACT divide (rows sum to 1).
    logits = (jnp.dot(c.astype(wcls_ref.dtype), wcls_ref[...],
                      preferred_element_type=jnp.float32) + bcls_ref[...])  # (bn, Cp)
    m = jnp.max(logits, axis=1, keepdims=True)
    e = jnp.exp(logits - m)
    out_ref[...] = e / jnp.sum(e, axis=1, keepdims=True)


def review_lstm_forward(x_nld, w_ih, w_hh, b_ih, b_hh, w_cls, b_cls,
                        batch_block=None, matmul_dtype=jnp.bfloat16):
    """x_nld: (N, L, D) batch-first, like PyTorch with batch_first=True.

    Weights use PyTorch layouts: w_ih (4H, D), w_hh (4H, H), biases (4H,) with gate
    row blocks ordered [i, f, g, o]; classifier w_cls (C, H), b_cls (C,).
    """
    N, L, D = x_nld.shape
    H = w_hh.shape[1]
    C = w_cls.shape[0]

    # Lane/sublane-friendly padded sizes.
    Hp = _round_up(H, 128)           # each gate block a whole lane tile
    H4p = 4 * Hp
    Cp = _round_up(C, 128)           # lane-dense, unmasked output stores

    # Batch tile: multiple of 8 sublanes, capped at the MXU M width (256 on v6e/v7x,
    # 128 on v5e).  Multiple batch blocks form a 'parallel' grid axis that gets
    # sharded across TensorCores on v7x.
    if batch_block is None:
        batch_block = min(_round_up(N, 8), 256)
    bn = _round_up(batch_block, 8)
    N_pad = _round_up(N, bn)
    nb = N_pad // bn

    # --- Weight layout: PyTorch gate-row order [i, f, g, o] -> column blocks
    # [i, f, o, g] (one sigmoid covers i/f/o, one tanh covers g), each block
    # zero-padded from H to Hp columns.  Padded lanes stay zero through the
    # recurrence (preact 0 -> i/f/o = 0.5, g = 0 -> c_pad = h_pad = 0).
    def gate_blocks(w):
        return (w[:H], w[H:2 * H], w[3 * H:], w[2 * H:3 * H])   # i, f, o, g

    wih_t = jnp.zeros((D, H4p), matmul_dtype)
    for k, blk in enumerate(gate_blocks(w_ih)):                 # blk: (H, D)
        wih_t = wih_t.at[:, k * Hp:k * Hp + H].set(
            jnp.transpose(blk).astype(matmul_dtype))

    whh_t = jnp.zeros((Hp, H4p), matmul_dtype)
    for k, blk in enumerate(gate_blocks(w_hh)):                 # blk: (H, H)
        whh_t = whh_t.at[:H, k * Hp:k * Hp + H].set(
            jnp.transpose(blk).astype(matmul_dtype))

    b_sum = (b_ih + b_hh).astype(jnp.float32)
    b = jnp.zeros((1, H4p), jnp.float32)
    for k, blk in enumerate(gate_blocks(b_sum)):
        b = b.at[0, k * Hp:k * Hp + H].set(blk)

    # Classifier: padded rows zero; padded class lanes biased to -1e9 so softmax over
    # the padded lane width equals softmax over the real C classes.
    wcls_t = jnp.zeros((Hp, Cp), matmul_dtype).at[:H, :C].set(
        jnp.transpose(w_cls).astype(matmul_dtype))
    bcls = jnp.full((1, Cp), -1e9, jnp.float32).at[0, :C].set(
        b_cls.astype(jnp.float32))

    # Batch padded with zeros (padded rows run through with bias-only gates and are
    # sliced off), then arranged per batch block as time-major rows (t*bn + n_local)
    # so the input projection for each block is a single 2-D matmul in the prologue.
    x_pad = jnp.zeros((N_pad, L, D), matmul_dtype).at[:N].set(
        x_nld.astype(matmul_dtype))
    x_blocks = (jnp.transpose(x_pad.reshape(nb, bn, L, D), (0, 2, 1, 3))
                .reshape(nb, L * bn, D))

    flops = (2 * L * N_pad * D * H4p          # hoisted input projection
             + 2 * L * N_pad * Hp * H4p       # recurrent matmuls
             + 2 * N_pad * Hp * Cp)           # classifier
    transcendentals = L * N_pad * (H4p + Hp) + N_pad * Cp
    bytes_accessed = int(
        x_blocks.size * x_blocks.dtype.itemsize
        + wih_t.size * wih_t.dtype.itemsize
        + whh_t.size * whh_t.dtype.itemsize
        + wcls_t.size * wcls_t.dtype.itemsize
        + (b.size + bcls.size + N_pad * Cp) * 4)

    # VMEM limit sized from the actual footprint (+ double-buffer / spill headroom),
    # clamped to stay comfortable on v7x's 64 MiB physical VMEM.
    resident = int((wih_t.size + whh_t.size + wcls_t.size) * 2
                   + (b.size + bcls.size) * 4)
    per_block = int(L * bn * D * 2 + bn * Cp * 4        # x block + out block
                    + L * bn * H4p * 2                  # bf16 xw value (may spill)
                    + 8 * bn * H4p * 4)                 # gate / activation temporaries
    vmem_limit = int(min(max(2 * (resident + 2 * per_block), 16 * 1024 * 1024),
                         48 * 1024 * 1024))

    out = pl.pallas_call(
        functools.partial(_lstm_classifier_kernel, seq_len=L),
        out_shape=jax.ShapeDtypeStruct((N_pad, Cp), jnp.float32),
        grid=(nb,),
        in_specs=[
            pl.BlockSpec((None, L * bn, D), lambda i: (i, 0, 0)),   # batch-blocked x
            pl.BlockSpec((D, H4p), lambda i: (0, 0)),               # weights: resident
            pl.BlockSpec((Hp, H4p), lambda i: (0, 0)),
            pl.BlockSpec((1, H4p), lambda i: (0, 0)),
            pl.BlockSpec((Hp, Cp), lambda i: (0, 0)),
            pl.BlockSpec((1, Cp), lambda i: (0, 0)),
        ],
        out_specs=pl.BlockSpec((bn, Cp), lambda i: (i, 0)),
        compiler_params=pltpu.CompilerParams(
            dimension_semantics=("parallel",),       # batch blocks across TensorCores
            vmem_limit_bytes=vmem_limit),
        cost_estimate=pl.CostEstimate(flops=flops,
                                      transcendentals=transcendentals,
                                      bytes_accessed=bytes_accessed),
    )(x_blocks, wih_t, whh_t, b, wcls_t, bcls)
    return out[:N, :C]


def _reference_forward(x_nld, w_ih, w_hh, b_ih, b_hh, w_cls, b_cls,
                       matmul_dtype=jnp.float32, round_xw=False):
    """Pure-JAX reference (mirrors torch.nn.LSTM + Linear + softmax).

    matmul_dtype / round_xw reproduce the kernel's bf16 roundings (bf16 MXU operands,
    bf16-stored input projection; f32 accumulation / state) for a tight check."""
    N, L, D = x_nld.shape
    H = w_hh.shape[1]
    md = matmul_dtype

    def mm(a, bmat):
        return jnp.dot(a.astype(md), bmat.astype(md),
                       preferred_element_type=jnp.float32)

    xw = (mm(x_nld.reshape(N * L, D), w_ih.T).reshape(N, L, 4 * H)
          + (b_ih + b_hh).astype(jnp.float32))
    if round_xw:
        xw = xw.astype(jnp.bfloat16).astype(jnp.float32)

    def step(carry, xw_t):
        h, c = carry
        gates = xw_t + mm(h, w_hh.T)
        i, f, g, o = jnp.split(gates, 4, axis=1)
        c = jax.nn.sigmoid(f) * c + jax.nn.sigmoid(i) * jnp.tanh(g)
        h = jax.nn.sigmoid(o) * jnp.tanh(c)
        return (h, c), None

    h0 = jnp.zeros((N, H), jnp.float32)
    c0 = jnp.zeros((N, H), jnp.float32)
    (_, c_n), _ = lax.scan(step, (h0, c0), jnp.transpose(xw, (1, 0, 2)))
    logits = mm(c_n, w_cls.T) + b_cls
    return jax.nn.softmax(logits, axis=1)


if __name__ == "__main__":
    # small shapes consistent with the module's forward
    N, L, D, H, C = 4, 8, 16, 32, 2

    key = jax.random.PRNGKey(0)
    ks = jax.random.split(key, 8)
    bound = 1.0 / (H ** 0.5)   # PyTorch default init range for LSTM / Linear

    x = jax.random.normal(ks[0], (N, L, D), dtype=jnp.float32)
    w_ih = jax.random.uniform(ks[1], (4 * H, D), minval=-bound, maxval=bound)
    w_hh = jax.random.uniform(ks[2], (4 * H, H), minval=-bound, maxval=bound)
    b_ih = jax.random.uniform(ks[3], (4 * H,), minval=-bound, maxval=bound)
    b_hh = jax.random.uniform(ks[4], (4 * H,), minval=-bound, maxval=bound)
    w_cls = jax.random.uniform(ks[5], (C, H), minval=-bound, maxval=bound)
    b_cls = jax.random.uniform(ks[6], (C,), minval=-bound, maxval=bound)

    out = review_lstm_forward(x, w_ih, w_hh, b_ih, b_hh, w_cls, b_cls)
    out = jax.block_until_ready(out)
    assert out.shape == (N, C)
    assert bool(jnp.all(jnp.isfinite(out)))

    # Matched reference (same bf16 roundings as the kernel): tight check.
    ref_bf16 = _reference_forward(x, w_ih, w_hh, b_ih, b_hh, w_cls, b_cls,
                                  matmul_dtype=jnp.bfloat16, round_xw=True)
    assert jnp.allclose(out, ref_bf16, atol=5e-3, rtol=0.0), \
        "mismatch vs matched (bf16-matmul) reference"

    # Pure-f32 reference: loose check (only bf16 MXU-operand rounding differs).
    ref_f32 = _reference_forward(x, w_ih, w_hh, b_ih, b_hh, w_cls, b_cls,
                                 matmul_dtype=jnp.float32)
    assert jnp.allclose(out, ref_f32, atol=5e-2, rtol=0.0), \
        "mismatch vs f32 reference"

    print("KERNEL_OK")
</pallas_src>

<mosaic_0001>
module attributes {stable_mosaic.version = 11 : i64} {
  func.func @_lstm_classifier_kernel(%arg0: i32, %arg1: memref<1x64x16xbf16, #tpu.memory_space<vmem>>, %arg2: memref<16x512xbf16, #tpu.memory_space<vmem>>, %arg3: memref<128x512xbf16, #tpu.memory_space<vmem>>, %arg4: memref<1x512xf32, #tpu.memory_space<vmem>>, %arg5: memref<128x128xbf16, #tpu.memory_space<vmem>>, %arg6: memref<1x128xf32, #tpu.memory_space<vmem>>, %arg7: memref<8x128xf32, #tpu.memory_space<vmem>>) attributes {dimension_semantics = [#tpu.dimension_semantics<parallel>], iteration_bounds = array<i64: 1>, scalar_prefetch = 0 : i64, scratch_operands = 0 : i64, tpu.core_type = #tpu.core_type<tc>, window_params = [{transform_indices = @transform_0, window_bounds = array<i64: 1, 64, 16>}, {pipeline_mode = #tpu.pipeline_mode<synchronous>, transform_indices = @transform_1, window_bounds = array<i64: 16, 512>}, {pipeline_mode = #tpu.pipeline_mode<synchronous>, transform_indices = @transform_2, window_bounds = array<i64: 128, 512>}, {pipeline_mode = #tpu.pipeline_mode<synchronous>, transform_indices = @transform_3, window_bounds = array<i64: 1, 512>}, {pipeline_mode = #tpu.pipeline_mode<synchronous>, transform_indices = @transform_4, window_bounds = array<i64: 128, 128>}, {pipeline_mode = #tpu.pipeline_mode<synchronous>, transform_indices = @transform_5, window_bounds = array<i64: 1, 128>}, {transform_indices = @transform_6, window_bounds = array<i64: 8, 128>}]} {
    %c0 = arith.constant 0 : index
    %c0_0 = arith.constant 0 : index
    %c0_1 = arith.constant 0 : index
    %0 = vector.load %arg1[%c0, %c0_0, %c0_1] : memref<1x64x16xbf16, #tpu.memory_space<vmem>>, vector<1x64x16xbf16>
    %1 = vector.shape_cast %0 : vector<1x64x16xbf16> to vector<64x16xbf16>
    %c0_2 = arith.constant 0 : index
    %c0_3 = arith.constant 0 : index
    %2 = vector.load %arg2[%c0_2, %c0_3] : memref<16x512xbf16, #tpu.memory_space<vmem>>, vector<16x512xbf16>
    %cst = arith.constant dense<0.000000e+00> : vector<64x512xf32>
    %3 = tpu.matmul %1, %2, %cst {dimension_numbers = #tpu.dot_dimension_numbers<[1], [0], [0], [1], [0, 0, 1, 1], [], []>} : vector<64x16xbf16>, vector<16x512xbf16>, vector<64x512xf32> -> vector<64x512xf32>
    %c0_4 = arith.constant 0 : index
    %c0_5 = arith.constant 0 : index
    %4 = vector.load %arg4[%c0_4, %c0_5] : memref<1x512xf32, #tpu.memory_space<vmem>>, vector<1x512xf32>
    %5 = vector.broadcast %4 : vector<1x512xf32> to vector<64x512xf32>
    %6 = arith.addf %3, %5 : vector<64x512xf32>
    %7 = arith.truncf %6 : vector<64x512xf32> to vector<64x512xbf16>
    %c0_6 = arith.constant 0 : index
    %c0_7 = arith.constant 0 : index
    %8 = vector.load %arg3[%c0_6, %c0_7] : memref<128x512xbf16, #tpu.memory_space<vmem>>, vector<128x512xbf16>
    %cst_8 = arith.constant 0.000000e+00 : bf16
    %9 = vector.broadcast %cst_8 : bf16 to vector<8x128xbf16>
    %cst_9 = arith.constant 0.000000e+00 : f32
    %10 = vector.broadcast %cst_9 : f32 to vector<8x128xf32>
    %11 = vector.extract_strided_slice %7 {offsets = [0, 0], sizes = [8, 512], strides = [1, 1]} : vector<64x512xbf16> to vector<8x512xbf16>
    %cst_10 = arith.constant dense<0.000000e+00> : vector<8x512xf32>
    %12 = tpu.matmul %9, %8, %cst_10 {dimension_numbers = #tpu.dot_dimension_numbers<[1], [0], [0], [1], [0, 0, 1, 1], [], []>} : vector<8x128xbf16>, vector<128x512xbf16>, vector<8x512xf32> -> vector<8x512xf32>
    %13 = arith.extf %11 : vector<8x512xbf16> to vector<8x512xf32>
    %14 = arith.addf %13, %12 : vector<8x512xf32>
    %15 = vector.extract_strided_slice %14 {offsets = [0, 0], sizes = [8, 384], strides = [1, 1]} : vector<8x512xf32> to vector<8x384xf32>
    %16 = arith.negf %15 : vector<8x384xf32>
    %17 = math.exp %16 : vector<8x384xf32>
    %cst_11 = arith.constant 1.000000e+00 : f32
    %18 = vector.broadcast %cst_11 : f32 to vector<8x384xf32>
    %19 = arith.addf %18, %17 : vector<8x384xf32>
    %20 = arith.divf %18, %19 : vector<8x384xf32>
    %21 = vector.extract_strided_slice %14 {offsets = [0, 384], sizes = [8, 128], strides = [1, 1]} : vector<8x512xf32> to vector<8x128xf32>
    %22 = math.tanh %21 : vector<8x128xf32>
    %23 = vector.extract_strided_slice %20 {offsets = [0, 0], sizes = [8, 128], strides = [1, 1]} : vector<8x384xf32> to vector<8x128xf32>
    %24 = vector.extract_strided_slice %20 {offsets = [0, 128], sizes = [8, 128], strides = [1, 1]} : vector<8x384xf32> to vector<8x128xf32>
    %25 = vector.extract_strided_slice %20 {offsets = [0, 256], sizes = [8, 128], strides = [1, 1]} : vector<8x384xf32> to vector<8x128xf32>
    %26 = arith.mulf %24, %10 : vector<8x128xf32>
    %27 = arith.mulf %23, %22 : vector<8x128xf32>
    %28 = arith.addf %26, %27 : vector<8x128xf32>
    %29 = math.tanh %28 : vector<8x128xf32>
    %30 = arith.mulf %25, %29 : vector<8x128xf32>
    %31 = arith.truncf %30 : vector<8x128xf32> to vector<8x128xbf16>
    %32 = vector.extract_strided_slice %7 {offsets = [8, 0], sizes = [8, 512], strides = [1, 1]} : vector<64x512xbf16> to vector<8x512xbf16>
    %cst_12 = arith.constant dense<0.000000e+00> : vector<8x512xf32>
    %33 = tpu.matmul %31, %8, %cst_12 {dimension_numbers = #tpu.dot_dimension_numbers<[1], [0], [0], [1], [0, 0, 1, 1], [], []>} : vector<8x128xbf16>, vector<128x512xbf16>, vector<8x512xf32> -> vector<8x512xf32>
    %34 = arith.extf %32 : vector<8x512xbf16> to vector<8x512xf32>
    %35 = arith.addf %34, %33 : vector<8x512xf32>
    %36 = vector.extract_strided_slice %35 {offsets = [0, 0], sizes = [8, 384], strides = [1, 1]} : vector<8x512xf32> to vector<8x384xf32>
    %37 = arith.negf %36 : vector<8x384xf32>
    %38 = math.exp %37 : vector<8x384xf32>
    %cst_13 = arith.constant 1.000000e+00 : f32
    %39 = vector.broadcast %cst_13 : f32 to vector<8x384xf32>
    %40 = arith.addf %39, %38 : vector<8x384xf32>
    %41 = arith.divf %39, %40 : vector<8x384xf32>
    %42 = vector.extract_strided_slice %35 {offsets = [0, 384], sizes = [8, 128], strides = [1, 1]} : vector<8x512xf32> to vector<8x128xf32>
    %43 = math.tanh %42 : vector<8x128xf32>
    %44 = vector.extract_strided_slice %41 {offsets = [0, 0], sizes = [8, 128], strides = [1, 1]} : vector<8x384xf32> to vector<8x128xf32>
    %45 = vector.extract_strided_slice %41 {offsets = [0, 128], sizes = [8, 128], strides = [1, 1]} : vector<8x384xf32> to vector<8x128xf32>
    %46 = vector.extract_strided_slice %41 {offsets = [0, 256], sizes = [8, 128], strides = [1, 1]} : vector<8x384xf32> to vector<8x128xf32>
    %47 = arith.mulf %45, %28 : vector<8x128xf32>
    %48 = arith.mulf %44, %43 : vector<8x128xf32>
    %49 = arith.addf %47, %48 : vector<8x128xf32>
    %50 = math.tanh %49 : vector<8x128xf32>
    %51 = arith.mulf %46, %50 : vector<8x128xf32>
    %52 = arith.truncf %51 : vector<8x128xf32> to vector<8x128xbf16>
    %53 = vector.extract_strided_slice %7 {offsets = [16, 0], sizes = [8, 512], strides = [1, 1]} : vector<64x512xbf16> to vector<8x512xbf16>
    %cst_14 = arith.constant dense<0.000000e+00> : vector<8x512xf32>
    %54 = tpu.matmul %52, %8, %cst_14 {dimension_numbers = #tpu.dot_dimension_numbers<[1], [0], [0], [1], [0, 0, 1, 1], [], []>} : vector<8x128xbf16>, vector<128x512xbf16>, vector<8x512xf32> -> vector<8x512xf32>
    %55 = arith.extf %53 : vector<8x512xbf16> to vector<8x512xf32>
    %56 = arith.addf %55, %54 : vector<8x512xf32>
    %57 = vector.extract_strided_slice %56 {offsets = [0, 0], sizes = [8, 384], strides = [1, 1]} : vector<8x512xf32> to vector<8x384xf32>
    %58 = arith.negf %57 : vector<8x384xf32>
    %59 = math.exp %58 : vector<8x384xf32>
    %cst_15 = arith.constant 1.000000e+00 : f32
    %60 = vector.broadcast %cst_15 : f32 to vector<8x384xf32>
    %61 = arith.addf %60, %59 : vector<8x384xf32>
    %62 = arith.divf %60, %61 : vector<8x384xf32>
    %63 = vector.extract_strided_slice %56 {offsets = [0, 384], sizes = [8, 128], strides = [1, 1]} : vector<8x512xf32> to vector<8x128xf32>
    %64 = math.tanh %63 : vector<8x128xf32>
    %65 = vector.extract_strided_slice %62 {offsets = [0, 0], sizes = [8, 128], strides = [1, 1]} : vector<8x384xf32> to vector<8x128xf32>
    %66 = vector.extract_strided_slice %62 {offsets = [0, 128], sizes = [8, 128], strides = [1, 1]} : vector<8x384xf32> to vector<8x128xf32>
    %67 = vector.extract_strided_slice %62 {offsets = [0, 256], sizes = [8, 128], strides = [1, 1]} : vector<8x384xf32> to vector<8x128xf32>
    %68 = arith.mulf %66, %49 : vector<8x128xf32>
    %69 = arith.mulf %65, %64 : vector<8x128xf32>
    %70 = arith.addf %68, %69 : vector<8x128xf32>
    %71 = math.tanh %70 : vector<8x128xf32>
    %72 = arith.mulf %67, %71 : vector<8x128xf32>
    %73 = arith.truncf %72 : vector<8x128xf32> to vector<8x128xbf16>
    %74 = vector.extract_strided_slice %7 {offsets = [24, 0], sizes = [8, 512], strides = [1, 1]} : vector<64x512xbf16> to vector<8x512xbf16>
    %cst_16 = arith.constant dense<0.000000e+00> : vector<8x512xf32>
    %75 = tpu.matmul %73, %8, %cst_16 {dimension_numbers = #tpu.dot_dimension_numbers<[1], [0], [0], [1], [0, 0, 1, 1], [], []>} : vector<8x128xbf16>, vector<128x512xbf16>, vector<8x512xf32> -> vector<8x512xf32>
    %76 = arith.extf %74 : vector<8x512xbf16> to vector<8x512xf32>
    %77 = arith.addf %76, %75 : vector<8x512xf32>
    %78 = vector.extract_strided_slice %77 {offsets = [0, 0], sizes = [8, 384], strides = [1, 1]} : vector<8x512xf32> to vector<8x384xf32>
    %79 = arith.negf %78 : vector<8x384xf32>
    %80 = math.exp %79 : vector<8x384xf32>
    %cst_17 = arith.constant 1.000000e+00 : f32
    %81 = vector.broadcast %cst_17 : f32 to vector<8x384xf32>
    %82 = arith.addf %81, %80 : vector<8x384xf32>
    %83 = arith.divf %81, %82 : vector<8x384xf32>
    %84 = vector.extract_strided_slice %77 {offsets = [0, 384], sizes = [8, 128], strides = [1, 1]} : vector<8x512xf32> to vector<8x128xf32>
    %85 = math.tanh %84 : vector<8x128xf32>
    %86 = vector.extract_strided_slice %83 {offsets = [0, 0], sizes = [8, 128], strides = [1, 1]} : vector<8x384xf32> to vector<8x128xf32>
    %87 = vector.extract_strided_slice %83 {offsets = [0, 128], sizes = [8, 128], strides = [1, 1]} : vector<8x384xf32> to vector<8x128xf32>
    %88 = vector.extract_strided_slice %83 {offsets = [0, 256], sizes = [8, 128], strides = [1, 1]} : vector<8x384xf32> to vector<8x128xf32>
    %89 = arith.mulf %87, %70 : vector<8x128xf32>
    %90 = arith.mulf %86, %85 : vector<8x128xf32>
    %91 = arith.addf %89, %90 : vector<8x128xf32>
    %92 = math.tanh %91 : vector<8x128xf32>
    %93 = arith.mulf %88, %92 : vector<8x128xf32>
    %94 = arith.truncf %93 : vector<8x128xf32> to vector<8x128xbf16>
    %95 = vector.extract_strided_slice %7 {offsets = [32, 0], sizes = [8, 512], strides = [1, 1]} : vector<64x512xbf16> to vector<8x512xbf16>
    %cst_18 = arith.constant dense<0.000000e+00> : vector<8x512xf32>
    %96 = tpu.matmul %94, %8, %cst_18 {dimension_numbers = #tpu.dot_dimension_numbers<[1], [0], [0], [1], [0, 0, 1, 1], [], []>} : vector<8x128xbf16>, vector<128x512xbf16>, vector<8x512xf32> -> vector<8x512xf32>
    %97 = arith.extf %95 : vector<8x512xbf16> to vector<8x512xf32>
    %98 = arith.addf %97, %96 : vector<8x512xf32>
    %99 = vector.extract_strided_slice %98 {offsets = [0, 0], sizes = [8, 384], strides = [1, 1]} : vector<8x512xf32> to vector<8x384xf32>
    %100 = arith.negf %99 : vector<8x384xf32>
    %101 = math.exp %100 : vector<8x384xf32>
    %cst_19 = arith.constant 1.000000e+00 : f32
    %102 = vector.broadcast %cst_19 : f32 to vector<8x384xf32>
    %103 = arith.addf %102, %101 : vector<8x384xf32>
    %104 = arith.divf %102, %103 : vector<8x384xf32>
    %105 = vector.extract_strided_slice %98 {offsets = [0, 384], sizes = [8, 128], strides = [1, 1]} : vector<8x512xf32> to vector<8x128xf32>
    %106 = math.tanh %105 : vector<8x128xf32>
    %107 = vector.extract_strided_slice %104 {offsets = [0, 0], sizes = [8, 128], strides = [1, 1]} : vector<8x384xf32> to vector<8x128xf32>
    %108 = vector.extract_strided_slice %104 {offsets = [0, 128], sizes = [8, 128], strides = [1, 1]} : vector<8x384xf32> to vector<8x128xf32>
    %109 = vector.extract_strided_slice %104 {offsets = [0, 256], sizes = [8, 128], strides = [1, 1]} : vector<8x384xf32> to vector<8x128xf32>
    %110 = arith.mulf %108, %91 : vector<8x128xf32>
    %111 = arith.mulf %107, %106 : vector<8x128xf32>
    %112 = arith.addf %110, %111 : vector<8x128xf32>
    %113 = math.tanh %112 : vector<8x128xf32>
    %114 = arith.mulf %109, %113 : vector<8x128xf32>
    %115 = arith.truncf %114 : vector<8x128xf32> to vector<8x128xbf16>
    %116 = vector.extract_strided_slice %7 {offsets = [40, 0], sizes = [8, 512], strides = [1, 1]} : vector<64x512xbf16> to vector<8x512xbf16>
    %cst_20 = arith.constant dense<0.000000e+00> : vector<8x512xf32>
    %117 = tpu.matmul %115, %8, %cst_20 {dimension_numbers = #tpu.dot_dimension_numbers<[1], [0], [0], [1], [0, 0, 1, 1], [], []>} : vector<8x128xbf16>, vector<128x512xbf16>, vector<8x512xf32> -> vector<8x512xf32>
    %118 = arith.extf %116 : vector<8x512xbf16> to vector<8x512xf32>
    %119 = arith.addf %118, %117 : vector<8x512xf32>
    %120 = vector.extract_strided_slice %119 {offsets = [0, 0], sizes = [8, 384], strides = [1, 1]} : vector<8x512xf32> to vector<8x384xf32>
    %121 = arith.negf %120 : vector<8x384xf32>
    %122 = math.exp %121 : vector<8x384xf32>
    %cst_21 = arith.constant 1.000000e+00 : f32
    %123 = vector.broadcast %cst_21 : f32 to vector<8x384xf32>
    %124 = arith.addf %123, %122 : vector<8x384xf32>
    %125 = arith.divf %123, %124 : vector<8x384xf32>
    %126 = vector.extract_strided_slice %119 {offsets = [0, 384], sizes = [8, 128], strides = [1, 1]} : vector<8x512xf32> to vector<8x128xf32>
    %127 = math.tanh %126 : vector<8x128xf32>
    %128 = vector.extract_strided_slice %125 {offsets = [0, 0], sizes = [8, 128], strides = [1, 1]} : vector<8x384xf32> to vector<8x128xf32>
    %129 = vector.extract_strided_slice %125 {offsets = [0, 128], sizes = [8, 128], strides = [1, 1]} : vector<8x384xf32> to vector<8x128xf32>
    %130 = vector.extract_strided_slice %125 {offsets = [0, 256], sizes = [8, 128], strides = [1, 1]} : vector<8x384xf32> to vector<8x128xf32>
    %131 = arith.mulf %129, %112 : vector<8x128xf32>
    %132 = arith.mulf %128, %127 : vector<8x128xf32>
    %133 = arith.addf %131, %132 : vector<8x128xf32>
    %134 = math.tanh %133 : vector<8x128xf32>
    %135 = arith.mulf %130, %134 : vector<8x128xf32>
    %136 = arith.truncf %135 : vector<8x128xf32> to vector<8x128xbf16>
    %137 = vector.extract_strided_slice %7 {offsets = [48, 0], sizes = [8, 512], strides = [1, 1]} : vector<64x512xbf16> to vector<8x512xbf16>
    %cst_22 = arith.constant dense<0.000000e+00> : vector<8x512xf32>
    %138 = tpu.matmul %136, %8, %cst_22 {dimension_numbers = #tpu.dot_dimension_numbers<[1], [0], [0], [1], [0, 0, 1, 1], [], []>} : vector<8x128xbf16>, vector<128x512xbf16>, vector<8x512xf32> -> vector<8x512xf32>
    %139 = arith.extf %137 : vector<8x512xbf16> to vector<8x512xf32>
    %140 = arith.addf %139, %138 : vector<8x512xf32>
    %141 = vector.extract_strided_slice %140 {offsets = [0, 0], sizes = [8, 384], strides = [1, 1]} : vector<8x512xf32> to vector<8x384xf32>
    %142 = arith.negf %141 : vector<8x384xf32>
    %143 = math.exp %142 : vector<8x384xf32>
    %cst_23 = arith.constant 1.000000e+00 : f32
    %144 = vector.broadcast %cst_23 : f32 to vector<8x384xf32>
    %145 = arith.addf %144, %143 : vector<8x384xf32>
    %146 = arith.divf %144, %145 : vector<8x384xf32>
    %147 = vector.extract_strided_slice %140 {offsets = [0, 384], sizes = [8, 128], strides = [1, 1]} : vector<8x512xf32> to vector<8x128xf32>
    %148 = math.tanh %147 : vector<8x128xf32>
    %149 = vector.extract_strided_slice %146 {offsets = [0, 0], sizes = [8, 128], strides = [1, 1]} : vector<8x384xf32> to vector<8x128xf32>
    %150 = vector.extract_strided_slice %146 {offsets = [0, 128], sizes = [8, 128], strides = [1, 1]} : vector<8x384xf32> to vector<8x128xf32>
    %151 = vector.extract_strided_slice %146 {offsets = [0, 256], sizes = [8, 128], strides = [1, 1]} : vector<8x384xf32> to vector<8x128xf32>
    %152 = arith.mulf %150, %133 : vector<8x128xf32>
    %153 = arith.mulf %149, %148 : vector<8x128xf32>
    %154 = arith.addf %152, %153 : vector<8x128xf32>
    %155 = math.tanh %154 : vector<8x128xf32>
    %156 = arith.mulf %151, %155 : vector<8x128xf32>
    %157 = arith.truncf %156 : vector<8x128xf32> to vector<8x128xbf16>
    %158 = vector.extract_strided_slice %7 {offsets = [56, 0], sizes = [8, 512], strides = [1, 1]} : vector<64x512xbf16> to vector<8x512xbf16>
    %cst_24 = arith.constant dense<0.000000e+00> : vector<8x512xf32>
    %159 = tpu.matmul %157, %8, %cst_24 {dimension_numbers = #tpu.dot_dimension_numbers<[1], [0], [0], [1], [0, 0, 1, 1], [], []>} : vector<8x128xbf16>, vector<128x512xbf16>, vector<8x512xf32> -> vector<8x512xf32>
    %160 = arith.extf %158 : vector<8x512xbf16> to vector<8x512xf32>
    %161 = arith.addf %160, %159 : vector<8x512xf32>
    %162 = vector.extract_strided_slice %161 {offsets = [0, 0], sizes = [8, 384], strides = [1, 1]} : vector<8x512xf32> to vector<8x384xf32>
    %163 = arith.negf %162 : vector<8x384xf32>
    %164 = math.exp %163 : vector<8x384xf32>
    %cst_25 = arith.constant 1.000000e+00 : f32
    %165 = vector.broadcast %cst_25 : f32 to vector<8x384xf32>
    %166 = arith.addf %165, %164 : vector<8x384xf32>
    %167 = arith.divf %165, %166 : vector<8x384xf32>
    %168 = vector.extract_strided_slice %161 {offsets = [0, 384], sizes = [8, 128], strides = [1, 1]} : vector<8x512xf32> to vector<8x128xf32>
    %169 = math.tanh %168 : vector<8x128xf32>
    %170 = vector.extract_strided_slice %167 {offsets = [0, 0], sizes = [8, 128], strides = [1, 1]} : vector<8x384xf32> to vector<8x128xf32>
    %171 = vector.extract_strided_slice %167 {offsets = [0, 128], sizes = [8, 128], strides = [1, 1]} : vector<8x384xf32> to vector<8x128xf32>
    %172 = arith.mulf %171, %154 : vector<8x128xf32>
    %173 = arith.mulf %170, %169 : vector<8x128xf32>
    %174 = arith.addf %172, %173 : vector<8x128xf32>
    %175 = arith.truncf %174 : vector<8x128xf32> to vector<8x128xbf16>
    %c0_26 = arith.constant 0 : index
    %c0_27 = arith.constant 0 : index
    %176 = vector.load %arg5[%c0_26, %c0_27] : memref<128x128xbf16, #tpu.memory_space<vmem>>, vector<128x128xbf16>
    %cst_28 = arith.constant dense<0.000000e+00> : vector<8x128xf32>
    %177 = tpu.matmul %175, %176, %cst_28 {dimension_numbers = #tpu.dot_dimension_numbers<[1], [0], [0], [1], [0, 0, 1, 1], [], []>} : vector<8x128xbf16>, vector<128x128xbf16>, vector<8x128xf32> -> vector<8x128xf32>
    %c0_29 = arith.constant 0 : index
    %c0_30 = arith.constant 0 : index
    %178 = vector.load %arg6[%c0_29, %c0_30] : memref<1x128xf32, #tpu.memory_space<vmem>>, vector<1x128xf32>
    %179 = vector.broadcast %178 : vector<1x128xf32> to vector<8x128xf32>
    %180 = arith.addf %177, %179 : vector<8x128xf32>
    %cst_31 = arith.constant dense<0xFF800000> : vector<8xf32>
    %181 = vector.multi_reduction <maximumf>, %180, %cst_31 [1] : vector<8x128xf32> to vector<8xf32>
    %182 = vector.shape_cast %181 : vector<8xf32> to vector<8x1xf32>
    %183 = vector.broadcast %182 : vector<8x1xf32> to vector<8x128xf32>
    %184 = arith.subf %180, %183 : vector<8x128xf32>
    %185 = math.exp %184 : vector<8x128xf32>
    %cst_32 = arith.constant dense<0.000000e+00> : vector<8xf32>
    %186 = vector.multi_reduction <add>, %185, %cst_32 [1] : vector<8x128xf32> to vector<8xf32>
    %187 = vector.shape_cast %186 : vector<8xf32> to vector<8x1xf32>
    %188 = vector.broadcast %187 : vector<8x1xf32> to vector<8x128xf32>
    %189 = arith.divf %185, %188 : vector<8x128xf32>
    %c0_33 = arith.constant 0 : index
    %c0_34 = arith.constant 0 : index
    %190 = vector.load %arg7[%c0_33, %c0_34] : memref<8x128xf32, #tpu.memory_space<vmem>>, vector<8x128xf32>
    tpu.vector_store %arg7[%c0_33, %c0_34], %189 {strides = array<i32>} : memref<8x128xf32, #tpu.memory_space<vmem>>, vector<8x128xf32>,
    return
  }
  func.func @transform_0(%arg0: i32) -> (i32, i32, i32) {
    %c0_i32 = arith.constant 0 : i32
    %c0_i32_0 = arith.constant 0 : i32
    %c0_i32_1 = arith.constant 0 : i32
    return %arg0, %c0_i32, %c0_i32_0 : i32, i32, i32
  }
  func.func @transform_1(%arg0: i32) -> (i32, i32) {
    %c0_i32 = arith.constant 0 : i32
    %c0_i32_0 = arith.constant 0 : i32
    %c0_i32_1 = arith.constant 0 : i32
    return %c0_i32, %c0_i32_0 : i32, i32
  }
  func.func @transform_2(%arg0: i32) -> (i32, i32) {
    %c0_i32 = arith.constant 0 : i32
    %c0_i32_0 = arith.constant 0 : i32
    %c0_i32_1 = arith.constant 0 : i32
    return %c0_i32, %c0_i32_0 : i32, i32
  }
  func.func @transform_3(%arg0: i32) -> (i32, i32) {
    %c0_i32 = arith.constant 0 : i32
    %c0_i32_0 = arith.constant 0 : i32
    %c0_i32_1 = arith.constant 0 : i32
    return %c0_i32, %c0_i32_0 : i32, i32
  }
  func.func @transform_4(%arg0: i32) -> (i32, i32) {
    %c0_i32 = arith.constant 0 : i32
    %c0_i32_0 = arith.constant 0 : i32
    %c0_i32_1 = arith.constant 0 : i32
    return %c0_i32, %c0_i32_0 : i32, i32
  }
  func.func @transform_5(%arg0: i32) -> (i32, i32) {
    %c0_i32 = arith.constant 0 : i32
    %c0_i32_0 = arith.constant 0 : i32
    %c0_i32_1 = arith.constant 0 : i32
    return %c0_i32, %c0_i32_0 : i32, i32
  }
  func.func @transform_6(%arg0: i32) -> (i32, i32) {
    %c0_i32 = arith.constant 0 : i32
    %c0_i32_0 = arith.constant 0 : i32
    return %arg0, %c0_i32 : i32, i32
  }
}

</mosaic_0001>

<llo_original>
// kernel: tpu_custom_call.1
$region0: #{tpu_custom_call.1}
  #allocation0 [shape = 'u32[]', space=smem, size = 0x4, offset = 0x4, fixed_abs, tag = 'smem constant byte address 0x4 - core index']
  #allocation1 [shape = 'u32[144,128]{1,0:T(1,128)}', space=vmem, size = 0x12000, scoped, tag = 'internal scratch']
  %s0 = inlined_call_operand.vmem [shape: bf16[1,64,16], index: 0, kind: input, shape index: {}]
  %s1 = inlined_call_operand.vmem [shape: bf16[16,512], index: 1, kind: input, shape index: {}]
  %s2 = inlined_call_operand.hbm [shape: bf16[128,512], index: 2, kind: input, shape index: {}]
  %s3 = inlined_call_operand.vmem [shape: f32[1,512], index: 3, kind: input, shape index: {}]
  %s4 = inlined_call_operand.hbm [shape: bf16[128,128], index: 4, kind: input, shape index: {}]
  %s5 = inlined_call_operand.vmem [shape: f32[1,128], index: 5, kind: input, shape index: {}]
  %s6 = inlined_call_operand.hbm [shape: f32[8,128], index: 6, kind: output, shape index: {}]
  %s7 = sld [smem:[#allocation0]]
  $region42: #{tpu_custom_call.1} parent=0
    _
  %s9 = ssub.s32 1, %s7
  %s10 = scalar_select 0, %s9, %s7
  $region1: #{tpu_custom_call.1} parent=0
    #allocation2 [shape = 'u8[131072]{0}', space=vmem, size = 0x20000, scoped, tag = 'input window, operand 2, single buffered']
    #allocation3 [shape = 's32[1]{0}', space=sflag, size = 0x4, scoped, tag = 'scoped memory for tpu_custom_call.1']
    #allocation4 [shape = 's32[1]{0}', space=sflag, size = 0x4, scoped, tag = 'scoped memory for tpu_custom_call.1']
    #allocation5 [shape = 'u8[32768]{0}', space=vmem, size = 0x8000, scoped, tag = 'input window, operand 4, single buffered']
    #allocation6 [shape = 's32[1]{0}', space=sflag, size = 0x4, scoped, tag = 'scoped memory for tpu_custom_call.1']
    #allocation7 [shape = 'u8[4096]{0}', space=vmem, size = 0x1000, scoped, tag = 'output window, operand 0, single buffered']
    %11 = vsyncpa [#allocation3], 0
    %12 = vsyncpa [#allocation6], 0
    %13 = vsyncpa [#allocation4], 0
    // Predicated region
    $region2: #{tpu_custom_call.1} parent=1 // pred_check
      _
    $region3: #{tpu_custom_call.1} parent=1 // pred_check_branch
      %15 = sbr.rel (0) target = $region5
    $region4: #{tpu_custom_call.1} parent=1 // pred_region
      _
    $region5: #{tpu_custom_call.1} parent=1 // pred_fallthru
      _
    // Predicated region
    $region6: #{tpu_custom_call.1} parent=1 // pred_check
      _
    $region7: #{tpu_custom_call.1} parent=1 // pred_check_branch
      %17 = sbr.rel (0) target = $region9
    $region8: #{tpu_custom_call.1} parent=1 // pred_region
      _
    $region9: #{tpu_custom_call.1} parent=1 // pred_fallthru
      _
    // Predicated region
    $region10: #{tpu_custom_call.1} parent=1 // pred_check
      _
    $region11: #{tpu_custom_call.1} parent=1 // pred_check_branch
      %19 = sbr.rel (0) target = $region13
    $region12: #{tpu_custom_call.1} parent=1 // pred_region
      %s21 = ssub.s32 4096, 4096
      %22 = vsyncadd [#allocation3], %s21
      %s23 = sshll.u32 [#allocation2], 4
      %s24 = int_to_ptr.vmem [resolvable:$true] %s23
      %29 = dma.hbm_to_vmem [thread:$0]  %s2, 4096, %s24, [#allocation3], 256, 256, 16
    $region13: #{tpu_custom_call.1} parent=1 // pred_fallthru
      _
    // Predicated region
    $region14: #{tpu_custom_call.1} parent=1 // pred_check
      _
    $region15: #{tpu_custom_call.1} parent=1 // pred_check_branch
      %31 = sbr.rel (0) target = $region17
    $region16: #{tpu_custom_call.1} parent=1 // pred_region
      _
    $region17: #{tpu_custom_call.1} parent=1 // pred_fallthru
      _
    // Predicated region
    $region18: #{tpu_custom_call.1} parent=1 // pred_check
      _
    $region19: #{tpu_custom_call.1} parent=1 // pred_check_branch
      %33 = sbr.rel (0) target = $region21
    $region20: #{tpu_custom_call.1} parent=1 // pred_region
      %s35 = ssub.s32 1024, 1024
      %36 = vsyncadd [#allocation6], %s35
      %s37 = sshll.u32 [#allocation5], 4
      %s38 = int_to_ptr.vmem [resolvable:$true] %s37
      %43 = dma.hbm_to_vmem [thread:$0]  %s4, 1024, %s38, [#allocation6], 64, 64, 4
    $region21: #{tpu_custom_call.1} parent=1 // pred_fallthru
      _
    // Predicated region
    $region22: #{tpu_custom_call.1} parent=1 // pred_check
      _
    $region23: #{tpu_custom_call.1} parent=1 // pred_check_branch
      %45 = sbr.rel (0) target = $region25
    $region24: #{tpu_custom_call.1} parent=1 // pred_region
      _
    $region25: #{tpu_custom_call.1} parent=1 // pred_fallthru
      _
    // Predicated region
    $region26: #{tpu_custom_call.1} parent=1 // pred_check
      _
    $region27: #{tpu_custom_call.1} parent=1 // pred_check_branch
      %47 = sbr.rel (0) target = $region29
    $region28: #{tpu_custom_call.1} parent=1 // pred_region
      %48 = dma.done [#allocation3], 4096
    $region29: #{tpu_custom_call.1} parent=1 // pred_fallthru
      _
    // Predicated region
    $region30: #{tpu_custom_call.1} parent=1 // pred_check
      _
    $region31: #{tpu_custom_call.1} parent=1 // pred_check_branch
      %50 = sbr.rel (0) target = $region33
    $region32: #{tpu_custom_call.1} parent=1 // pred_region
      %51 = dma.done [#allocation6], 1024
    $region33: #{tpu_custom_call.1} parent=1 // pred_fallthru
      _
    %v53 = vld [vmem:[%s0] sm:$0xf]
    %v54 = vld [vmem:[%s0 + $0x4] sm:$0xf]
    %v55 = vld [vmem:[%s0 + $0x8] sm:$0xf]
    %v56 = vld [vmem:[%s0 + $0xc] sm:$0xf]
    %v57 = vld [vmem:[%s0 + $0x10] sm:$0xf]
    %v58 = vld [vmem:[%s0 + $0x14] sm:$0xf]
    %v59 = vld [vmem:[%s0 + $0x18] sm:$0xf]
    %v60 = vld [vmem:[%s0 + $0x1c] sm:$0xf]
    %v61 = vld [vmem:[%s1] sm:$0xff]
    %v62 = vld [vmem:[%s1 + $0x8] sm:$0xff]
    %v63 = vld [vmem:[%s1 + $0x10] sm:$0xff]
    %v64 = vld [vmem:[%s1 + $0x18] sm:$0xff]
    %v65 = vld [vmem:[%s3] sm:$0xf]
    %v67 = vlaneseq
    %v68 = vshrl.u32 %v67, 7
    %v69 = vsub.s32 0, %v68
    %v70 = vrot.slane %v65, %v69
    %v71 = vlaneseq
    %v72 = vshrl.u32 %v71, 7
    %v73 = vsub.s32 1, %v72
    %v74 = vrot.slane %v65, %v73
    %v75 = vlaneseq
    %v76 = vshrl.u32 %v75, 7
    %v77 = vsub.s32 2, %v76
    %v78 = vrot.slane %v65, %v77
    %v79 = vlaneseq
    %v80 = vshrl.u32 %v79, 7
    %v81 = vsub.s32 3, %v80
    %v82 = vrot.slane %v65, %v81
    %v95 = vunpack.c.l.b16 %v53
    %v96 = vunpack.c.l.b16 %v54
    %v97 = vunpack.c.l.b16 %v55
    %v98 = vunpack.c.l.b16 %v56
    %v99 = vunpack.c.l.b16 %v57
    %v100 = vunpack.c.l.b16 %v58
    %v101 = vunpack.c.l.b16 %v59
    %v102 = vunpack.c.l.b16 %v60
    %v103 = vpack.c.b16 %v96, %v95
    %v104 = vpack.c.b16 %v98, %v97
    %v105 = vpack.c.b16 %v100, %v99
    %v106 = vpack.c.b16 %v102, %v101
    %v111 = vunpack.c.l.b16 %v61
    %v112 = vunpack.c.h.b16 %v61
    %v113 = vunpack.c.l.b16 %v62
    %v114 = vunpack.c.h.b16 %v62
    %v115 = vunpack.c.l.b16 %v63
    %v116 = vunpack.c.h.b16 %v63
    %v117 = vunpack.c.l.b16 %v64
    %v118 = vunpack.c.h.b16 %v64
    %v119 = vpack.c.b16 %v115, %v111
    %v120 = vpack.c.b16 %v116, %v112
    %v121 = vpack.c.b16 %v117, %v113
    %v122 = vpack.c.b16 %v118, %v114
    %vm127 = vcmask 130048
    %v129 = vsel %vm127, %v103, 0
    %v132 = vsel %vm127, %v104, 0
    %v135 = vsel %vm127, %v105, 0
    %v138 = vsel %vm127, %v106, 0
    %140 = vmatprep.subr.bf16.mxu0 %v120
    %141 = vmatpush1.bf16.msra.mxu0 %v119
    %142 = vmatprep.subr.bf16.mxu0 0
    %143 = vmatpush1.bf16.msra.mxu0 0
    %144 = vmatprep.subr.bf16.mxu0 0
    %145 = vmatpush1.bf16.msra.mxu0 0
    %146 = vmatprep.subr.bf16.mxu0 0
    %147 = vmatpush1.bf16.msra.mxu0 0
    %148 = vmatprep.subr.bf16.mxu0 0
    %149 = vmatpush1.bf16.msra.mxu0 0
    %150 = vmatprep.subr.bf16.mxu0 0
    %151 = vmatpush1.bf16.msra.mxu0 0
    %152 = vmatprep.subr.bf16.mxu0 0
    %153 = vmatpush1.bf16.msra.mxu0 0
    %154 = vmatprep.subr.bf16.mxu0 0
    %155 = vmatpush1.bf16.msra.mxu0 0
    %156 = vmatprep.subr.bf16.mxu0 0
    %157 = vmatpush1.bf16.msra.mxu0 0
    %158 = vmatprep.subr.bf16.mxu0 0
    %159 = vmatpush1.bf16.msra.mxu0 0
    %160 = vmatprep.subr.bf16.mxu0 0
    %161 = vmatpush1.bf16.msra.mxu0 0
    %162 = vmatprep.subr.bf16.mxu0 0
    %163 = vmatpush1.bf16.msra.mxu0 0
    %164 = vmatprep.subr.bf16.mxu0 0
    %165 = vmatpush1.bf16.msra.mxu0 0
    %166 = vmatprep.subr.bf16.mxu0 0
    %167 = vmatpush1.bf16.msra.mxu0 0
    %168 = vmatprep.subr.bf16.mxu0 0
    %169 = vmatpush1.bf16.msra.mxu0 0
    %170 = vmatprep.subr.bf16.mxu0 0
    %171 = vmatpush1.bf16.msra.mxu0 0
    %172 = vmatprep.mubr.bf16.mxu0 0
    %173 = vmatmul.mubr.bf16.gmra.mrb[0].mxu0 %v129
    %v174 = vpop.f32.mrb[0].mxu0
    %v175 = vadd.f32 %v70, %v174
    %v176 = vpop.f32.mrb[0].mxu0
    %v177 = vadd.f32 %v74, %v176
    %v178 = vpop.f32.mrb[0].mxu0
    %v179 = vadd.f32 %v70, %v178
    %v180 = vpop.f32.mrb[0].mxu0
    %v181 = vadd.f32 %v74, %v180
    %182 = vmatprep.mubr.bf16.mxu0 0
    %183 = vmatmul.mubr.bf16.gmra.mrb[0].mxu0 %v132
    %v184 = vpop.f32.mrb[0].mxu0
    %v185 = vadd.f32 %v70, %v184
    %v186 = vpop.f32.mrb[0].mxu0
    %v187 = vadd.f32 %v74, %v186
    %v188 = vpop.f32.mrb[0].mxu0
    %v189 = vadd.f32 %v70, %v188
    %v190 = vpop.f32.mrb[0].mxu0
    %v191 = vadd.f32 %v74, %v190
    %192 = vmatprep.mubr.bf16.mxu0 0
    %193 = vmatmul.mubr.bf16.gmra.mrb[0].mxu0 %v135
    %v194 = vpop.f32.mrb[0].mxu0
    %v195 = vadd.f32 %v70, %v194
    %v196 = vpop.f32.mrb[0].mxu0
    %v197 = vadd.f32 %v74, %v196
    %v198 = vpop.f32.mrb[0].mxu0
    %v199 = vadd.f32 %v70, %v198
    %v200 = vpop.f32.mrb[0].mxu0
    %v201 = vadd.f32 %v74, %v200
    %202 = vmatprep.mubr.bf16.mxu0 0
    %203 = vmatmul.mubr.bf16.gmra.mrb[0].mxu0 %v138
    %v204 = vpop.f32.mrb[0].mxu0
    %v205 = vadd.f32 %v70, %v204
    %v206 = vpop.f32.mrb[0].mxu0
    %v207 = vadd.f32 %v74, %v206
    %v208 = vpop.f32.mrb[0].mxu0
    %v209 = vadd.f32 %v70, %v208
    %v210 = vpop.f32.mrb[0].mxu0
    %v211 = vadd.f32 %v74, %v210
    %212 = vdwg.mxu0
    %213 = vmatprep.subr.bf16.mxu0 %v122
    %214 = vmatpush1.bf16.msra.mxu0 %v121
    %215 = vmatprep.subr.bf16.mxu0 0
    %216 = vmatpush1.bf16.msra.mxu0 0
    %217 = vmatprep.subr.bf16.mxu0 0
    %218 = vmatpush1.bf16.msra.mxu0 0
    %219 = vmatprep.subr.bf16.mxu0 0
    %220 = vmatpush1.bf16.msra.mxu0 0
    %221 = vmatprep.subr.bf16.mxu0 0
    %222 = vmatpush1.bf16.msra.mxu0 0
    %223 = vmatprep.subr.bf16.mxu0 0
    %224 = vmatpush1.bf16.msra.mxu0 0
    %225 = vmatprep.subr.bf16.mxu0 0
    %226 = vmatpush1.bf16.msra.mxu0 0
    %227 = vmatprep.subr.bf16.mxu0 0
    %228 = vmatpush1.bf16.msra.mxu0 0
    %229 = vmatprep.subr.bf16.mxu0 0
    %230 = vmatpush1.bf16.msra.mxu0 0
    %231 = vmatprep.subr.bf16.mxu0 0
    %232 = vmatpush1.bf16.msra.mxu0 0
    %233 = vmatprep.subr.bf16.mxu0 0
    %234 = vmatpush1.bf16.msra.mxu0 0
    %235 = vmatprep.subr.bf16.mxu0 0
    %236 = vmatpush1.bf16.msra.mxu0 0
    %237 = vmatprep.subr.bf16.mxu0 0
    %238 = vmatpush1.bf16.msra.mxu0 0
    %239 = vmatprep.subr.bf16.mxu0 0
    %240 = vmatpush1.bf16.msra.mxu0 0
    %241 = vmatprep.subr.bf16.mxu0 0
    %242 = vmatpush1.bf16.msra.mxu0 0
    %243 = vmatprep.subr.bf16.mxu0 0
    %244 = vmatpush1.bf16.msra.mxu0 0
    %245 = vmatprep.mubr.bf16.mxu0 0
    %246 = vmatmul.mubr.bf16.gmra.mrb[0].mxu0 %v129
    %v247 = vpop.f32.mrb[0].mxu0
    %v248 = vadd.f32 %v78, %v247
    %v249 = vpop.f32.mrb[0].mxu0
    %v250 = vadd.f32 %v82, %v249
    %v251 = vpop.f32.mrb[0].mxu0
    %v252 = vadd.f32 %v78, %v251
    %v253 = vpop.f32.mrb[0].mxu0
    %v254 = vadd.f32 %v82, %v253
    %255 = vmatprep.mubr.bf16.mxu0 0
    %256 = vmatmul.mubr.bf16.gmra.mrb[0].mxu0 %v132
    %v257 = vpop.f32.mrb[0].mxu0
    %v258 = vadd.f32 %v78, %v257
    %v259 = vpop.f32.mrb[0].mxu0
    %v260 = vadd.f32 %v82, %v259
    %v261 = vpop.f32.mrb[0].mxu0
    %v262 = vadd.f32 %v78, %v261
    %v263 = vpop.f32.mrb[0].mxu0
    %v264 = vadd.f32 %v82, %v263
    %265 = vmatprep.mubr.bf16.mxu0 0
    %266 = vmatmul.mubr.bf16.gmra.mrb[0].mxu0 %v135
    %v267 = vpop.f32.mrb[0].mxu0
    %v268 = vadd.f32 %v78, %v267
    %v269 = vpop.f32.mrb[0].mxu0
    %v270 = vadd.f32 %v82, %v269
    %v271 = vpop.f32.mrb[0].mxu0
    %v272 = vadd.f32 %v78, %v271
    %v273 = vpop.f32.mrb[0].mxu0
    %v274 = vadd.f32 %v82, %v273
    %275 = vmatprep.mubr.bf16.mxu0 0
    %276 = vmatmul.mubr.bf16.gmra.mrb[0].mxu0 %v138
    %v277 = vpop.f32.mrb[0].mxu0
    %v278 = vadd.f32 %v78, %v277
    %v279 = vpop.f32.mrb[0].mxu0
    %v280 = vadd.f32 %v82, %v279
    %v281 = vpop.f32.mrb[0].mxu0
    %v282 = vadd.f32 %v78, %v281
    %v283 = vpop.f32.mrb[0].mxu0
    %v284 = vadd.f32 %v82, %v283
    %285 = vdwg.mxu0
    %v286 = vpack.c.bf16 %v179, %v175
    %v287 = vpack.c.bf16 %v181, %v177
    %v288 = vpack.c.bf16 %v252, %v248
    %v289 = vpack.c.bf16 %v254, %v250
    %v290 = vpack.c.bf16 %v189, %v185
    %v291 = vpack.c.bf16 %v191, %v187
    %v292 = vpack.c.bf16 %v262, %v258
    %v293 = vpack.c.bf16 %v264, %v260
    %v294 = vpack.c.bf16 %v199, %v195
    %v295 = vpack.c.bf16 %v201, %v197
    %v296 = vpack.c.bf16 %v272, %v268
    %v297 = vpack.c.bf16 %v274, %v270
    %v298 = vpack.c.bf16 %v209, %v205
    %v299 = vpack.c.bf16 %v211, %v207
    %v300 = vpack.c.bf16 %v282, %v278
    %v301 = vpack.c.bf16 %v284, %v280
    %v302 = vld [vmem:[#allocation2] sm:$0xff]
    %v303 = vld [vmem:[#allocation2 + $0x8] sm:$0xff]
    %v304 = vld [vmem:[#allocation2 + $0x10] sm:$0xff]
    %v305 = vld [vmem:[#allocation2 + $0x18] sm:$0xff]
    %v306 = vld [vmem:[#allocation2 + $0x20] sm:$0xff]
    %v307 = vld [vmem:[#allocation2 + $0x28] sm:$0xff]
    %v308 = vld [vmem:[#allocation2 + $0x30] sm:$0xff]
    %v309 = vld [vmem:[#allocation2 + $0x38] sm:$0xff]
    %v310 = vld [vmem:[#allocation2 + $0x40] sm:$0xff]
    %v311 = vld [vmem:[#allocation2 + $0x48] sm:$0xff]
    %v312 = vld [vmem:[#allocation2 + $0x50] sm:$0xff]
    %v313 = vld [vmem:[#allocation2 + $0x58] sm:$0xff]
    %v314 = vld [vmem:[#allocation2 + $0x60] sm:$0xff]
    %v315 = vld [vmem:[#allocation2 + $0x68] sm:$0xff]
    %v316 = vld [vmem:[#allocation2 + $0x70] sm:$0xff]
    %v317 = vld [vmem:[#allocation2 + $0x78] sm:$0xff]
    %v318 = vld [vmem:[#allocation2 + $0x80] sm:$0xff]
    %v319 = vld [vmem:[#allocation2 + $0x88] sm:$0xff]
    %v320 = vld [vmem:[#allocation2 + $0x90] sm:$0xff]
    %v321 = vld [vmem:[#allocation2 + $0x98] sm:$0xff]
    %v322 = vld [vmem:[#allocation2 + $0xa0] sm:$0xff]
    %v323 = vld [vmem:[#allocation2 + $0xa8] sm:$0xff]
    %v324 = vld [vmem:[#allocation2 + $0xb0] sm:$0xff]
    %v325 = vld [vmem:[#allocation2 + $0xb8] sm:$0xff]
    %v326 = vld [vmem:[#allocation2 + $0xc0] sm:$0xff]
    %v327 = vld [vmem:[#allocation2 + $0xc8] sm:$0xff]
    %v328 = vld [vmem:[#allocation2 + $0xd0] sm:$0xff]
    %v329 = vld [vmem:[#allocation2 + $0xd8] sm:$0xff]
    %v330 = vld [vmem:[#allocation2 + $0xe0] sm:$0xff]
    %v331 = vld [vmem:[#allocation2 + $0xe8] sm:$0xff]
    %v332 = vld [vmem:[#allocation2 + $0xf0] sm:$0xff]
    %v333 = vld [vmem:[#allocation2 + $0xf8] sm:$0xff]
    %v366 = vunpack.c.l.b16 %v302
    %v367 = vunpack.c.h.b16 %v302
    %v368 = vunpack.c.l.b16 %v303
    %v369 = vunpack.c.h.b16 %v303
    %v370 = vunpack.c.l.b16 %v304
    %v371 = vunpack.c.h.b16 %v304
    %v372 = vunpack.c.l.b16 %v305
    %v373 = vunpack.c.h.b16 %v305
    %v374 = vunpack.c.l.b16 %v306
    %v375 = vunpack.c.h.b16 %v306
    %v376 = vunpack.c.l.b16 %v307
    %v377 = vunpack.c.h.b16 %v307
    %v378 = vunpack.c.l.b16 %v308
    %v379 = vunpack.c.h.b16 %v308
    %v380 = vunpack.c.l.b16 %v309
    %v381 = vunpack.c.h.b16 %v309
    %v382 = vunpack.c.l.b16 %v310
    %v383 = vunpack.c.h.b16 %v310
    %v384 = vunpack.c.l.b16 %v311
    %v385 = vunpack.c.h.b16 %v311
    %v386 = vunpack.c.l.b16 %v312
    %v387 = vunpack.c.h.b16 %v312
    %v388 = vunpack.c.l.b16 %v313
    %v389 = vunpack.c.h.b16 %v313
    %v390 = vunpack.c.l.b16 %v314
    %v391 = vunpack.c.h.b16 %v314
    %v392 = vunpack.c.l.b16 %v315
    %v393 = vunpack.c.h.b16 %v315
    %v394 = vunpack.c.l.b16 %v316
    %v395 = vunpack.c.h.b16 %v316
    %v396 = vunpack.c.l.b16 %v317
    %v397 = vunpack.c.h.b16 %v317
    %v398 = vunpack.c.l.b16 %v318
    %v399 = vunpack.c.h.b16 %v318
    %v400 = vunpack.c.l.b16 %v319
    %v401 = vunpack.c.h.b16 %v319
    %v402 = vunpack.c.l.b16 %v320
    %v403 = vunpack.c.h.b16 %v320
    %v404 = vunpack.c.l.b16 %v321
    %v405 = vunpack.c.h.b16 %v321
    %v406 = vunpack.c.l.b16 %v322
    %v407 = vunpack.c.h.b16 %v322
    %v408 = vunpack.c.l.b16 %v323
    %v409 = vunpack.c.h.b16 %v323
    %v410 = vunpack.c.l.b16 %v324
    %v411 = vunpack.c.h.b16 %v324
    %v412 = vunpack.c.l.b16 %v325
    %v413 = vunpack.c.h.b16 %v325
    %v414 = vunpack.c.l.b16 %v326
    %v415 = vunpack.c.h.b16 %v326
    %v416 = vunpack.c.l.b16 %v327
    %v417 = vunpack.c.h.b16 %v327
    %v418 = vunpack.c.l.b16 %v328
    %v419 = vunpack.c.h.b16 %v328
    %v420 = vunpack.c.l.b16 %v329
    %v421 = vunpack.c.h.b16 %v329
    %v422 = vunpack.c.l.b16 %v330
    %v423 = vunpack.c.h.b16 %v330
    %v424 = vunpack.c.l.b16 %v331
    %v425 = vunpack.c.h.b16 %v331
    %v426 = vunpack.c.l.b16 %v332
    %v427 = vunpack.c.h.b16 %v332
    %v428 = vunpack.c.l.b16 %v333
    %v429 = vunpack.c.h.b16 %v333
    %v430 = vpack.c.b16 %v370, %v366
    %v431 = vpack.c.b16 %v371, %v367
    %v432 = vpack.c.b16 %v372, %v368
    %v433 = vpack.c.b16 %v373, %v369
    %v434 = vpack.c.b16 %v378, %v374
    %v435 = vpack.c.b16 %v379, %v375
    %v436 = vpack.c.b16 %v380, %v376
    %v437 = vpack.c.b16 %v381, %v377
    %v438 = vpack.c.b16 %v386, %v382
    %v439 = vpack.c.b16 %v387, %v383
    %v440 = vpack.c.b16 %v388, %v384
    %v441 = vpack.c.b16 %v389, %v385
    %v442 = vpack.c.b16 %v394, %v390
    %v443 = vpack.c.b16 %v395, %v391
    %v444 = vpack.c.b16 %v396, %v392
    %v445 = vpack.c.b16 %v397, %v393
    %v446 = vpack.c.b16 %v402, %v398
    %v447 = vpack.c.b16 %v403, %v399
    %v448 = vpack.c.b16 %v404, %v400
    %v449 = vpack.c.b16 %v405, %v401
    %v450 = vpack.c.b16 %v410, %v406
    %v451 = vpack.c.b16 %v411, %v407
    %v452 = vpack.c.b16 %v412, %v408
    %v453 = vpack.c.b16 %v413, %v409
    %v454 = vpack.c.b16 %v418, %v414
    %v455 = vpack.c.b16 %v419, %v415
    %v456 = vpack.c.b16 %v420, %v416
    %v457 = vpack.c.b16 %v421, %v417
    %v458 = vpack.c.b16 %v426, %v422
    %v459 = vpack.c.b16 %v427, %v423
    %v460 = vpack.c.b16 %v428, %v424
    %v461 = vpack.c.b16 %v429, %v425
    %494 = vmatprep.subr.bf16.mxu0 %v431
    %495 = vmatpush1.bf16.msra.mxu0 %v430
    %496 = vmatprep.subr.bf16.mxu0 %v435
    %497 = vmatpush1.bf16.msra.mxu0 %v434
    %498 = vmatprep.subr.bf16.mxu0 %v439
    %499 = vmatpush1.bf16.msra.mxu0 %v438
    %500 = vmatprep.subr.bf16.mxu0 %v443
    %501 = vmatpush1.bf16.msra.mxu0 %v442
    %502 = vmatprep.subr.bf16.mxu0 %v447
    %503 = vmatpush1.bf16.msra.mxu0 %v446
    %504 = vmatprep.subr.bf16.mxu0 %v451
    %505 = vmatpush1.bf16.msra.mxu0 %v450
    %506 = vmatprep.subr.bf16.mxu0 %v455
    %507 = vmatpush1.bf16.msra.mxu0 %v454
    %508 = vmatprep.subr.bf16.mxu0 %v459
    %509 = vmatpush1.bf16.msra.mxu0 %v458
    %510 = vmatprep.subr.bf16.mxu0 0
    %511 = vmatpush1.bf16.msra.mxu0 0
    %512 = vmatprep.subr.bf16.mxu0 0
    %513 = vmatpush1.bf16.msra.mxu0 0
    %514 = vmatprep.subr.bf16.mxu0 0
    %515 = vmatpush1.bf16.msra.mxu0 0
    %516 = vmatprep.subr.bf16.mxu0 0
    %517 = vmatpush1.bf16.msra.mxu0 0
    %518 = vmatprep.subr.bf16.mxu0 0
    %519 = vmatpush1.bf16.msra.mxu0 0
    %520 = vmatprep.subr.bf16.mxu0 0
    %521 = vmatpush1.bf16.msra.mxu0 0
    %522 = vmatprep.subr.bf16.mxu0 0
    %523 = vmatpush1.bf16.msra.mxu0 0
    %524 = vmatprep.subr.bf16.mxu0 0
    %525 = vmatpush1.bf16.msra.mxu0 0
    %526 = vmatprep.mubr.bf16.mxu0 0
    %527 = vmatmul.mubr.bf16.gmra.mrb[0].mxu0 0
    %v528 = vpop.f32.mrb[0].mxu0
    %v529 = vadd.f32 0.0, %v528
    %v530 = vpop.f32.mrb[0].mxu0
    %v531 = vadd.f32 0.0, %v530
    %v532 = vpop.f32.mrb[0].mxu0
    %v533 = vpop.f32.mrb[0].mxu0
    %534 = vdwg.mxu0
    %535 = vmatprep.subr.bf16.mxu0 %v433
    %536 = vmatpush1.bf16.msra.mxu0 %v432
    %537 = vmatprep.subr.bf16.mxu0 %v437
    %538 = vmatpush1.bf16.msra.mxu0 %v436
    %539 = vmatprep.subr.bf16.mxu0 %v441
    %540 = vmatpush1.bf16.msra.mxu0 %v440
    %541 = vmatprep.subr.bf16.mxu0 %v445
    %542 = vmatpush1.bf16.msra.mxu0 %v444
    %543 = vmatprep.subr.bf16.mxu0 %v449
    %544 = vmatpush1.bf16.msra.mxu0 %v448
    %545 = vmatprep.subr.bf16.mxu0 %v453
    %546 = vmatpush1.bf16.msra.mxu0 %v452
    %547 = vmatprep.subr.bf16.mxu0 %v457
    %548 = vmatpush1.bf16.msra.mxu0 %v456
    %549 = vmatprep.subr.bf16.mxu0 %v461
    %550 = vmatpush1.bf16.msra.mxu0 %v460
    %551 = vmatprep.subr.bf16.mxu0 0
    %552 = vmatpush1.bf16.msra.mxu0 0
    %553 = vmatprep.subr.bf16.mxu0 0
    %554 = vmatpush1.bf16.msra.mxu0 0
    %555 = vmatprep.subr.bf16.mxu0 0
    %556 = vmatpush1.bf16.msra.mxu0 0
    %557 = vmatprep.subr.bf16.mxu0 0
    %558 = vmatpush1.bf16.msra.mxu0 0
    %559 = vmatprep.subr.bf16.mxu0 0
    %560 = vmatpush1.bf16.msra.mxu0 0
    %561 = vmatprep.subr.bf16.mxu0 0
    %562 = vmatpush1.bf16.msra.mxu0 0
    %563 = vmatprep.subr.bf16.mxu0 0
    %564 = vmatpush1.bf16.msra.mxu0 0
    %565 = vmatprep.subr.bf16.mxu0 0
    %566 = vmatpush1.bf16.msra.mxu0 0
    %567 = vmatprep.mubr.bf16.mxu0 0
    %568 = vmatmul.mubr.bf16.gmra.mrb[0].mxu0 0
    %v569 = vpop.f32.mrb[0].mxu0
    %v570 = vadd.f32 0.0, %v569
    %v571 = vpop.f32.mrb[0].mxu0
    %v572 = vadd.f32 0.0, %v571
    %v573 = vpop.f32.mrb[0].mxu0
    %v574 = vpop.f32.mrb[0].mxu0
    %575 = vdwg.mxu0
    %v576 = vunpack.c.l.bf16 %v286
    %v577 = vunpack.c.l.bf16 %v287
    %v578 = vunpack.c.l.bf16 %v288
    %v579 = vunpack.c.l.bf16 %v289
    %v580 = vadd.f32 %v576, %v529
    %v581 = vadd.f32 %v577, %v531
    %v582 = vadd.f32 %v578, %v570
    %v583 = vadd.f32 %v579, %v572
    %v584 = vxor.u32 %v580, 2147483648
    %v585 = vxor.u32 %v581, 2147483648
    %v586 = vxor.u32 %v582, 2147483648
    %v587 = vmul.f32 %v584, 1.442695
    %v588 = vpow.pop %v587
    %v589 = vmul.f32 %v585, 1.442695
    %v590 = vpow.pop %v589
    %v591 = vmul.f32 %v586, 1.442695
    %v592 = vpow.pop %v591
    %v593 = vadd.f32 %v588, 1.0
    %v594 = vadd.f32 %v590, 1.0
    %v595 = vadd.f32 %v592, 1.0
    %v596 = vrcp.pop %v593
    %v597 = vmul.f32 1.0, %v596
    %v598 = vrcp.pop %v594
    %v599 = vmul.f32 1.0, %v598
    %v600 = vrcp.pop %v595
    %v601 = vmul.f32 1.0, %v600
    %v602 = vtanh.pop %v583
    %v603 = vmul.f32 %v599, 0.0
    %v604 = vmul.f32 %v597, %v602
    %v605 = vadd.f32 %v603, %v604
    %v606 = vtanh.pop %v605
    %v607 = vmul.f32 %v601, %v606
    %v608 = vpack.c.bf16 %v607, %v607
    %609 = vmatprep.subr.bf16.mxu0 %v431
    %610 = vmatpush1.bf16.msra.mxu0 %v430
    %611 = vmatprep.subr.bf16.mxu0 %v435
    %612 = vmatpush1.bf16.msra.mxu0 %v434
    %613 = vmatprep.subr.bf16.mxu0 %v439
    %614 = vmatpush1.bf16.msra.mxu0 %v438
    %615 = vmatprep.subr.bf16.mxu0 %v443
    %616 = vmatpush1.bf16.msra.mxu0 %v442
    %617 = vmatprep.subr.bf16.mxu0 %v447
    %618 = vmatpush1.bf16.msra.mxu0 %v446
    %619 = vmatprep.subr.bf16.mxu0 %v451
    %620 = vmatpush1.bf16.msra.mxu0 %v450
    %621 = vmatprep.subr.bf16.mxu0 %v455
    %622 = vmatpush1.bf16.msra.mxu0 %v454
    %623 = vmatprep.subr.bf16.mxu0 %v459
    %624 = vmatpush1.bf16.msra.mxu0 %v458
    %625 = vmatprep.subr.bf16.mxu0 0
    %626 = vmatpush1.bf16.msra.mxu0 0
    %627 = vmatprep.subr.bf16.mxu0 0
    %628 = vmatpush1.bf16.msra.mxu0 0
    %629 = vmatprep.subr.bf16.mxu0 0
    %630 = vmatpush1.bf16.msra.mxu0 0
    %631 = vmatprep.subr.bf16.mxu0 0
    %632 = vmatpush1.bf16.msra.mxu0 0
    %633 = vmatprep.subr.bf16.mxu0 0
    %634 = vmatpush1.bf16.msra.mxu0 0
    %635 = vmatprep.subr.bf16.mxu0 0
    %636 = vmatpush1.bf16.msra.mxu0 0
    %637 = vmatprep.subr.bf16.mxu0 0
    %638 = vmatpush1.bf16.msra.mxu0 0
    %639 = vmatprep.subr.bf16.mxu0 0
    %640 = vmatpush1.bf16.msra.mxu0 0
    %641 = vmatprep.mubr.bf16.mxu0 0
    %642 = vmatmul.mubr.bf16.gmra.mrb[0].mxu0 %v608
    %v643 = vpop.f32.mrb[0].mxu0
    %v644 = vadd.f32 0.0, %v643
    %v645 = vpop.f32.mrb[0].mxu0
    %v646 = vadd.f32 0.0, %v645
    %v647 = vpop.f32.mrb[0].mxu0
    %v648 = vpop.f32.mrb[0].mxu0
    %649 = vdwg.mxu0
    %650 = vmatprep.subr.bf16.mxu0 %v433
    %651 = vmatpush1.bf16.msra.mxu0 %v432
    %652 = vmatprep.subr.bf16.mxu0 %v437
    %653 = vmatpush1.bf16.msra.mxu0 %v436
    %654 = vmatprep.subr.bf16.mxu0 %v441
    %655 = vmatpush1.bf16.msra.mxu0 %v440
    %656 = vmatprep.subr.bf16.mxu0 %v445
    %657 = vmatpush1.bf16.msra.mxu0 %v444
    %658 = vmatprep.subr.bf16.mxu0 %v449
    %659 = vmatpush1.bf16.msra.mxu0 %v448
    %660 = vmatprep.subr.bf16.mxu0 %v453
    %661 = vmatpush1.bf16.msra.mxu0 %v452
    %662 = vmatprep.subr.bf16.mxu0 %v457
    %663 = vmatpush1.bf16.msra.mxu0 %v456
    %664 = vmatprep.subr.bf16.mxu0 %v461
    %665 = vmatpush1.bf16.msra.mxu0 %v460
    %666 = vmatprep.subr.bf16.mxu0 0
    %667 = vmatpush1.bf16.msra.mxu0 0
    %668 = vmatprep.subr.bf16.mxu0 0
    %669 = vmatpush1.bf16.msra.mxu0 0
    %670 = vmatprep.subr.bf16.mxu0 0
    %671 = vmatpush1.bf16.msra.mxu0 0
    %672 = vmatprep.subr.bf16.mxu0 0
    %673 = vmatpush1.bf16.msra.mxu0 0
    %674 = vmatprep.subr.bf16.mxu0 0
    %675 = vmatpush1.bf16.msra.mxu0 0
    %676 = vmatprep.subr.bf16.mxu0 0
    %677 = vmatpush1.bf16.msra.mxu0 0
    %678 = vmatprep.subr.bf16.mxu0 0
    %679 = vmatpush1.bf16.msra.mxu0 0
    %680 = vmatprep.subr.bf16.mxu0 0
    %681 = vmatpush1.bf16.msra.mxu0 0
    %682 = vmatprep.mubr.bf16.mxu0 0
    %683 = vmatmul.mubr.bf16.gmra.mrb[0].mxu0 %v608
    %v684 = vpop.f32.mrb[0].mxu0
    %v685 = vadd.f32 0.0, %v684
    %v686 = vpop.f32.mrb[0].mxu0
    %v687 = vadd.f32 0.0, %v686
    %v688 = vpop.f32.mrb[0].mxu0
    %v689 = vpop.f32.mrb[0].mxu0
    %690 = vdwg.mxu0
    %v695 = vrot.slane %v286, 4
    %v696 = vrot.slane %v287, 4
    %v697 = vrot.slane %v288, 4
    %v698 = vrot.slane %v289, 4
    %v703 = vunpack.c.l.bf16 %v695
    %v704 = vunpack.c.l.bf16 %v696
    %v705 = vunpack.c.l.bf16 %v697
    %v706 = vunpack.c.l.bf16 %v698
    %v707 = vadd.f32 %v703, %v644
    %v708 = vadd.f32 %v704, %v646
    %v709 = vadd.f32 %v705, %v685
    %v710 = vadd.f32 %v706, %v687
    %v711 = vxor.u32 %v707, 2147483648
    %v712 = vxor.u32 %v708, 2147483648
    %v713 = vxor.u32 %v709, 2147483648
    %v714 = vmul.f32 %v711, 1.442695
    %v715 = vpow.pop %v714
    %v716 = vmul.f32 %v712, 1.442695
    %v717 = vpow.pop %v716
    %v718 = vmul.f32 %v713, 1.442695
    %v719 = vpow.pop %v718
    %v720 = vadd.f32 %v715, 1.0
    %v721 = vadd.f32 %v717, 1.0
    %v722 = vadd.f32 %v719, 1.0
    %v723 = vrcp.pop %v720
    %v724 = vmul.f32 1.0, %v723
    %v725 = vrcp.pop %v721
    %v726 = vmul.f32 1.0, %v725
    %v727 = vrcp.pop %v722
    %v728 = vmul.f32 1.0, %v727
    %v729 = vtanh.pop %v710
    %v730 = vmul.f32 %v726, %v605
    %v731 = vmul.f32 %v724, %v729
    %v732 = vadd.f32 %v730, %v731
    %v733 = vtanh.pop %v732
    %v734 = vmul.f32 %v728, %v733
    %v735 = vpack.c.bf16 %v734, %v734
    %736 = vmatprep.subr.bf16.mxu0 %v431
    %737 = vmatpush1.bf16.msra.mxu0 %v430
    %738 = vmatprep.subr.bf16.mxu0 %v435
    %739 = vmatpush1.bf16.msra.mxu0 %v434
    %740 = vmatprep.subr.bf16.mxu0 %v439
    %741 = vmatpush1.bf16.msra.mxu0 %v438
    %742 = vmatprep.subr.bf16.mxu0 %v443
    %743 = vmatpush1.bf16.msra.mxu0 %v442
    %744 = vmatprep.subr.bf16.mxu0 %v447
    %745 = vmatpush1.bf16.msra.mxu0 %v446
    %746 = vmatprep.subr.bf16.mxu0 %v451
    %747 = vmatpush1.bf16.msra.mxu0 %v450
    %748 = vmatprep.subr.bf16.mxu0 %v455
    %749 = vmatpush1.bf16.msra.mxu0 %v454
    %750 = vmatprep.subr.bf16.mxu0 %v459
    %751 = vmatpush1.bf16.msra.mxu0 %v458
    %752 = vmatprep.subr.bf16.mxu0 0
    %753 = vmatpush1.bf16.msra.mxu0 0
    %754 = vmatprep.subr.bf16.mxu0 0
    %755 = vmatpush1.bf16.msra.mxu0 0
    %756 = vmatprep.subr.bf16.mxu0 0
    %757 = vmatpush1.bf16.msra.mxu0 0
    %758 = vmatprep.subr.bf16.mxu0 0
    %759 = vmatpush1.bf16.msra.mxu0 0
    %760 = vmatprep.subr.bf16.mxu0 0
    %761 = vmatpush1.bf16.msra.mxu0 0
    %762 = vmatprep.subr.bf16.mxu0 0
    %763 = vmatpush1.bf16.msra.mxu0 0
    %764 = vmatprep.subr.bf16.mxu0 0
    %765 = vmatpush1.bf16.msra.mxu0 0
    %766 = vmatprep.subr.bf16.mxu0 0
    %767 = vmatpush1.bf16.msra.mxu0 0
    %768 = vmatprep.mubr.bf16.mxu0 0
    %769 = vmatmul.mubr.bf16.gmra.mrb[0].mxu0 %v735
    %v770 = vpop.f32.mrb[0].mxu0
    %v771 = vadd.f32 0.0, %v770
    %v772 = vpop.f32.mrb[0].mxu0
    %v773 = vadd.f32 0.0, %v772
    %v774 = vpop.f32.mrb[0].mxu0
    %v775 = vpop.f32.mrb[0].mxu0
    %776 = vdwg.mxu0
    %777 = vmatprep.subr.bf16.mxu0 %v433
    %778 = vmatpush1.bf16.msra.mxu0 %v432
    %779 = vmatprep.subr.bf16.mxu0 %v437
    %780 = vmatpush1.bf16.msra.mxu0 %v436
    %781 = vmatprep.subr.bf16.mxu0 %v441
    %782 = vmatpush1.bf16.msra.mxu0 %v440
    %783 = vmatprep.subr.bf16.mxu0 %v445
    %784 = vmatpush1.bf16.msra.mxu0 %v444
    %785 = vmatprep.subr.bf16.mxu0 %v449
    %786 = vmatpush1.bf16.msra.mxu0 %v448
    %787 = vmatprep.subr.bf16.mxu0 %v453
    %788 = vmatpush1.bf16.msra.mxu0 %v452
    %789 = vmatprep.subr.bf16.mxu0 %v457
    %790 = vmatpush1.bf16.msra.mxu0 %v456
    %791 = vmatprep.subr.bf16.mxu0 %v461
    %792 = vmatpush1.bf16.msra.mxu0 %v460
    %793 = vmatprep.subr.bf16.mxu0 0
    %794 = vmatpush1.bf16.msra.mxu0 0
    %795 = vmatprep.subr.bf16.mxu0 0
    %796 = vmatpush1.bf16.msra.mxu0 0
    %797 = vmatprep.subr.bf16.mxu0 0
    %798 = vmatpush1.bf16.msra.mxu0 0
    %799 = vmatprep.subr.bf16.mxu0 0
    %800 = vmatpush1.bf16.msra.mxu0 0
    %801 = vmatprep.subr.bf16.mxu0 0
    %802 = vmatpush1.bf16.msra.mxu0 0
    %803 = vmatprep.subr.bf16.mxu0 0
    %804 = vmatpush1.bf16.msra.mxu0 0
    %805 = vmatprep.subr.bf16.mxu0 0
    %806 = vmatpush1.bf16.msra.mxu0 0
    %807 = vmatprep.subr.bf16.mxu0 0
    %808 = vmatpush1.bf16.msra.mxu0 0
    %809 = vmatprep.mubr.bf16.mxu0 0
    %810 = vmatmul.mubr.bf16.gmra.mrb[0].mxu0 %v735
    %v811 = vpop.f32.mrb[0].mxu0
    %v812 = vadd.f32 0.0, %v811
    %v813 = vpop.f32.mrb[0].mxu0
    %v814 = vadd.f32 0.0, %v813
    %v815 = vpop.f32.mrb[0].mxu0
    %v816 = vpop.f32.mrb[0].mxu0
    %817 = vdwg.mxu0
    %v818 = vunpack.c.l.bf16 %v290
    %v819 = vunpack.c.l.bf16 %v291
    %v820 = vunpack.c.l.bf16 %v292
    %v821 = vunpack.c.l.bf16 %v293
    %v822 = vadd.f32 %v818, %v771
    %v823 = vadd.f32 %v819, %v773
    %v824 = vadd.f32 %v820, %v812
    %v825 = vadd.f32 %v821, %v814
    %v826 = vxor.u32 %v822, 2147483648
    %v827 = vxor.u32 %v823, 2147483648
    %v828 = vxor.u32 %v824, 2147483648
    %v829 = vmul.f32 %v826, 1.442695
    %v830 = vpow.pop %v829
    %v831 = vmul.f32 %v827, 1.442695
    %v832 = vpow.pop %v831
    %v833 = vmul.f32 %v828, 1.442695
    %v834 = vpow.pop %v833
    %v835 = vadd.f32 %v830, 1.0
    %v836 = vadd.f32 %v832, 1.0
    %v837 = vadd.f32 %v834, 1.0
    %v838 = vrcp.pop %v835
    %v839 = vmul.f32 1.0, %v838
    %v840 = vrcp.pop %v836
    %v841 = vmul.f32 1.0, %v840
    %v842 = vrcp.pop %v837
    %v843 = vmul.f32 1.0, %v842
    %v844 = vtanh.pop %v825
    %v845 = vmul.f32 %v841, %v732
    %v846 = vmul.f32 %v839, %v844
    %v847 = vadd.f32 %v845, %v846
    %v848 = vtanh.pop %v847
    %v849 = vmul.f32 %v843, %v848
    %v850 = vpack.c.bf16 %v849, %v849
    %851 = vmatprep.subr.bf16.mxu0 %v431
    %852 = vmatpush1.bf16.msra.mxu0 %v430
    %853 = vmatprep.subr.bf16.mxu0 %v435
    %854 = vmatpush1.bf16.msra.mxu0 %v434
    %855 = vmatprep.subr.bf16.mxu0 %v439
    %856 = vmatpush1.bf16.msra.mxu0 %v438
    %857 = vmatprep.subr.bf16.mxu0 %v443
    %858 = vmatpush1.bf16.msra.mxu0 %v442
    %859 = vmatprep.subr.bf16.mxu0 %v447
    %860 = vmatpush1.bf16.msra.mxu0 %v446
    %861 = vmatprep.subr.bf16.mxu0 %v451
    %862 = vmatpush1.bf16.msra.mxu0 %v450
    %863 = vmatprep.subr.bf16.mxu0 %v455
    %864 = vmatpush1.bf16.msra.mxu0 %v454
    %865 = vmatprep.subr.bf16.mxu0 %v459
    %866 = vmatpush1.bf16.msra.mxu0 %v458
    %867 = vmatprep.subr.bf16.mxu0 0
    %868 = vmatpush1.bf16.msra.mxu0 0
    %869 = vmatprep.subr.bf16.mxu0 0
    %870 = vmatpush1.bf16.msra.mxu0 0
    %871 = vmatprep.subr.bf16.mxu0 0
    %872 = vmatpush1.bf16.msra.mxu0 0
    %873 = vmatprep.subr.bf16.mxu0 0
    %874 = vmatpush1.bf16.msra.mxu0 0
    %875 = vmatprep.subr.bf16.mxu0 0
    %876 = vmatpush1.bf16.msra.mxu0 0
    %877 = vmatprep.subr.bf16.mxu0 0
    %878 = vmatpush1.bf16.msra.mxu0 0
    %879 = vmatprep.subr.bf16.mxu0 0
    %880 = vmatpush1.bf16.msra.mxu0 0
    %881 = vmatprep.subr.bf16.mxu0 0
    %882 = vmatpush1.bf16.msra.mxu0 0
    %883 = vmatprep.mubr.bf16.mxu0 0
    %884 = vmatmul.mubr.bf16.gmra.mrb[0].mxu0 %v850
    %v885 = vpop.f32.mrb[0].mxu0
    %v886 = vadd.f32 0.0, %v885
    %v887 = vpop.f32.mrb[0].mxu0
    %v888 = vadd.f32 0.0, %v887
    %v889 = vpop.f32.mrb[0].mxu0
    %v890 = vpop.f32.mrb[0].mxu0
    %891 = vdwg.mxu0
    %892 = vmatprep.subr.bf16.mxu0 %v433
    %893 = vmatpush1.bf16.msra.mxu0 %v432
    %894 = vmatprep.subr.bf16.mxu0 %v437
    %895 = vmatpush1.bf16.msra.mxu0 %v436
    %896 = vmatprep.subr.bf16.mxu0 %v441
    %897 = vmatpush1.bf16.msra.mxu0 %v440
    %898 = vmatprep.subr.bf16.mxu0 %v445
    %899 = vmatpush1.bf16.msra.mxu0 %v444
    %900 = vmatprep.subr.bf16.mxu0 %v449
    %901 = vmatpush1.bf16.msra.mxu0 %v448
    %902 = vmatprep.subr.bf16.mxu0 %v453
    %903 = vmatpush1.bf16.msra.mxu0 %v452
    %904 = vmatprep.subr.bf16.mxu0 %v457
    %905 = vmatpush1.bf16.msra.mxu0 %v456
    %906 = vmatprep.subr.bf16.mxu0 %v461
    %907 = vmatpush1.bf16.msra.mxu0 %v460
    %908 = vmatprep.subr.bf16.mxu0 0
    %909 = vmatpush1.bf16.msra.mxu0 0
    %910 = vmatprep.subr.bf16.mxu0 0
    %911 = vmatpush1.bf16.msra.mxu0 0
    %912 = vmatprep.subr.bf16.mxu0 0
    %913 = vmatpush1.bf16.msra.mxu0 0
    %914 = vmatprep.subr.bf16.mxu0 0
    %915 = vmatpush1.bf16.msra.mxu0 0
    %916 = vmatprep.subr.bf16.mxu0 0
    %917 = vmatpush1.bf16.msra.mxu0 0
    %918 = vmatprep.subr.bf16.mxu0 0
    %919 = vmatpush1.bf16.msra.mxu0 0
    %920 = vmatprep.subr.bf16.mxu0 0
    %921 = vmatpush1.bf16.msra.mxu0 0
    %922 = vmatprep.subr.bf16.mxu0 0
    %923 = vmatpush1.bf16.msra.mxu0 0
    %924 = vmatprep.mubr.bf16.mxu0 0
    %925 = vmatmul.mubr.bf16.gmra.mrb[0].mxu0 %v850
    %v926 = vpop.f32.mrb[0].mxu0
    %v927 = vadd.f32 0.0, %v926
    %v928 = vpop.f32.mrb[0].mxu0
    %v929 = vadd.f32 0.0, %v928
    %v930 = vpop.f32.mrb[0].mxu0
    %v931 = vpop.f32.mrb[0].mxu0
    %932 = vdwg.mxu0
    %v937 = vrot.slane %v290, 4
    %v938 = vrot.slane %v291, 4
    %v939 = vrot.slane %v292, 4
    %v940 = vrot.slane %v293, 4
    %v945 = vunpack.c.l.bf16 %v937
    %v946 = vunpack.c.l.bf16 %v938
    %v947 = vunpack.c.l.bf16 %v939
    %v948 = vunpack.c.l.bf16 %v940
    %v949 = vadd.f32 %v945, %v886
    %v950 = vadd.f32 %v946, %v888
    %v951 = vadd.f32 %v947, %v927
    %v952 = vadd.f32 %v948, %v929
    %v953 = vxor.u32 %v949, 2147483648
    %v954 = vxor.u32 %v950, 2147483648
    %v955 = vxor.u32 %v951, 2147483648
    %v956 = vmul.f32 %v953, 1.442695
    %v957 = vpow.pop %v956
    %v958 = vmul.f32 %v954, 1.442695
    %v959 = vpow.pop %v958
    %v960 = vmul.f32 %v955, 1.442695
    %v961 = vpow.pop %v960
    %v962 = vadd.f32 %v957, 1.0
    %v963 = vadd.f32 %v959, 1.0
    %v964 = vadd.f32 %v961, 1.0
    %v965 = vrcp.pop %v962
    %v966 = vmul.f32 1.0, %v965
    %v967 = vrcp.pop %v963
    %v968 = vmul.f32 1.0, %v967
    %v969 = vrcp.pop %v964
    %v970 = vmul.f32 1.0, %v969
    %v971 = vtanh.pop %v952
    %v972 = vmul.f32 %v968, %v847
    %v973 = vmul.f32 %v966, %v971
    %v974 = vadd.f32 %v972, %v973
    %v975 = vtanh.pop %v974
    %v976 = vmul.f32 %v970, %v975
    %v977 = vpack.c.bf16 %v976, %v976
    %978 = vmatprep.subr.bf16.mxu0 %v431
    %979 = vmatpush1.bf16.msra.mxu0 %v430
    %980 = vmatprep.subr.bf16.mxu0 %v435
    %981 = vmatpush1.bf16.msra.mxu0 %v434
    %982 = vmatprep.subr.bf16.mxu0 %v439
    %983 = vmatpush1.bf16.msra.mxu0 %v438
    %984 = vmatprep.subr.bf16.mxu0 %v443
    %985 = vmatpush1.bf16.msra.mxu0 %v442
    %986 = vmatprep.subr.bf16.mxu0 %v447
    %987 = vmatpush1.bf16.msra.mxu0 %v446
    %988 = vmatprep.subr.bf16.mxu0 %v451
    %989 = vmatpush1.bf16.msra.mxu0 %v450
    %990 = vmatprep.subr.bf16.mxu0 %v455
    %991 = vmatpush1.bf16.msra.mxu0 %v454
    %992 = vmatprep.subr.bf16.mxu0 %v459
    %993 = vmatpush1.bf16.msra.mxu0 %v458
    %994 = vmatprep.subr.bf16.mxu0 0
    %995 = vmatpush1.bf16.msra.mxu0 0
    %996 = vmatprep.subr.bf16.mxu0 0
    %997 = vmatpush1.bf16.msra.mxu0 0
    %998 = vmatprep.subr.bf16.mxu0 0
    %999 = vmatpush1.bf16.msra.mxu0 0
    %1000 = vmatprep.subr.bf16.mxu0 0
    %1001 = vmatpush1.bf16.msra.mxu0 0
    %1002 = vmatprep.subr.bf16.mxu0 0
    %1003 = vmatpush1.bf16.msra.mxu0 0
    %1004 = vmatprep.subr.bf16.mxu0 0
    %1005 = vmatpush1.bf16.msra.mxu0 0
    %1006 = vmatprep.subr.bf16.mxu0 0
    %1007 = vmatpush1.bf16.msra.mxu0 0
    %1008 = vmatprep.subr.bf16.mxu0 0
    %1009 = vmatpush1.bf16.msra.mxu0 0
    %1010 = vmatprep.mubr.bf16.mxu0 0
    %1011 = vmatmul.mubr.bf16.gmra.mrb[0].mxu0 %v977
    %v1012 = vpop.f32.mrb[0].mxu0
    %v1013 = vadd.f32 0.0, %v1012
    %v1014 = vpop.f32.mrb[0].mxu0
    %v1015 = vadd.f32 0.0, %v1014
    %v1016 = vpop.f32.mrb[0].mxu0
    %v1017 = vpop.f32.mrb[0].mxu0
    %1018 = vdwg.mxu0
    %1019 = vmatprep.subr.bf16.mxu0 %v433
    %1020 = vmatpush1.bf16.msra.mxu0 %v432
    %1021 = vmatprep.subr.bf16.mxu0 %v437
    %1022 = vmatpush1.bf16.msra.mxu0 %v436
    %1023 = vmatprep.subr.bf16.mxu0 %v441
    %1024 = vmatpush1.bf16.msra.mxu0 %v440
    %1025 = vmatprep.subr.bf16.mxu0 %v445
    %1026 = vmatpush1.bf16.msra.mxu0 %v444
    %1027 = vmatprep.subr.bf16.mxu0 %v449
    %1028 = vmatpush1.bf16.msra.mxu0 %v448
    %1029 = vmatprep.subr.bf16.mxu0 %v453
    %1030 = vmatpush1.bf16.msra.mxu0 %v452
    %1031 = vmatprep.subr.bf16.mxu0 %v457
    %1032 = vmatpush1.bf16.msra.mxu0 %v456
    %1033 = vmatprep.subr.bf16.mxu0 %v461
    %1034 = vmatpush1.bf16.msra.mxu0 %v460
    %1035 = vmatprep.subr.bf16.mxu0 0
    %1036 = vmatpush1.bf16.msra.mxu0 0
    %1037 = vmatprep.subr.bf16.mxu0 0
    %1038 = vmatpush1.bf16.msra.mxu0 0
    %1039 = vmatprep.subr.bf16.mxu0 0
    %1040 = vmatpush1.bf16.msra.mxu0 0
    %1041 = vmatprep.subr.bf16.mxu0 0
    %1042 = vmatpush1.bf16.msra.mxu0 0
    %1043 = vmatprep.subr.bf16.mxu0 0
    %1044 = vmatpush1.bf16.msra.mxu0 0
    %1045 = vmatprep.subr.bf16.mxu0 0
    %1046 = vmatpush1.bf16.msra.mxu0 0
    %1047 = vmatprep.subr.bf16.mxu0 0
    %1048 = vmatpush1.bf16.msra.mxu0 0
    %1049 = vmatprep.subr.bf16.mxu0 0
    %1050 = vmatpush1.bf16.msra.mxu0 0
    %1051 = vmatprep.mubr.bf16.mxu0 0
    %1052 = vmatmul.mubr.bf16.gmra.mrb[0].mxu0 %v977
    %v1053 = vpop.f32.mrb[0].mxu0
    %v1054 = vadd.f32 0.0, %v1053
    %v1055 = vpop.f32.mrb[0].mxu0
    %v1056 = vadd.f32 0.0, %v1055
    %v1057 = vpop.f32.mrb[0].mxu0
    %v1058 = vpop.f32.mrb[0].mxu0
    %1059 = vdwg.mxu0
    %v1060 = vunpack.c.l.bf16 %v294
    %v1061 = vunpack.c.l.bf16 %v295
    %v1062 = vunpack.c.l.bf16 %v296
    %v1063 = vunpack.c.l.bf16 %v297
    %v1064 = vadd.f32 %v1060, %v1013
    %v1065 = vadd.f32 %v1061, %v1015
    %v1066 = vadd.f32 %v1062, %v1054
    %v1067 = vadd.f32 %v1063, %v1056
    %v1068 = vxor.u32 %v1064, 2147483648
    %v1069 = vxor.u32 %v1065, 2147483648
    %v1070 = vxor.u32 %v1066, 2147483648
    %v1071 = vmul.f32 %v1068, 1.442695
    %v1072 = vpow.pop %v1071
    %v1073 = vmul.f32 %v1069, 1.442695
    %v1074 = vpow.pop %v1073
    %v1075 = vmul.f32 %v1070, 1.442695
    %v1076 = vpow.pop %v1075
    %v1077 = vadd.f32 %v1072, 1.0
    %v1078 = vadd.f32 %v1074, 1.0
    %v1079 = vadd.f32 %v1076, 1.0
    %v1080 = vrcp.pop %v1077
    %v1081 = vmul.f32 1.0, %v1080
    %v1082 = vrcp.pop %v1078
    %v1083 = vmul.f32 1.0, %v1082
    %v1084 = vrcp.pop %v1079
    %v1085 = vmul.f32 1.0, %v1084
    %v1086 = vtanh.pop %v1067
    %v1087 = vmul.f32 %v1083, %v974
    %v1088 = vmul.f32 %v1081, %v1086
    %v1089 = vadd.f32 %v1087, %v1088
    %v1090 = vtanh.pop %v1089
    %v1091 = vmul.f32 %v1085, %v1090
    %v1092 = vpack.c.bf16 %v1091, %v1091
    %1093 = vmatprep.subr.bf16.mxu0 %v431
    %1094 = vmatpush1.bf16.msra.mxu0 %v430
    %1095 = vmatprep.subr.bf16.mxu0 %v435
    %1096 = vmatpush1.bf16.msra.mxu0 %v434
    %1097 = vmatprep.subr.bf16.mxu0 %v439
    %1098 = vmatpush1.bf16.msra.mxu0 %v438
    %1099 = vmatprep.subr.bf16.mxu0 %v443
    %1100 = vmatpush1.bf16.msra.mxu0 %v442
    %1101 = vmatprep.subr.bf16.mxu0 %v447
    %1102 = vmatpush1.bf16.msra.mxu0 %v446
    %1103 = vmatprep.subr.bf16.mxu0 %v451
    %1104 = vmatpush1.bf16.msra.mxu0 %v450
    %1105 = vmatprep.subr.bf16.mxu0 %v455
    %1106 = vmatpush1.bf16.msra.mxu0 %v454
    %1107 = vmatprep.subr.bf16.mxu0 %v459
    %1108 = vmatpush1.bf16.msra.mxu0 %v458
    %1109 = vmatprep.subr.bf16.mxu0 0
    %1110 = vmatpush1.bf16.msra.mxu0 0
    %1111 = vmatprep.subr.bf16.mxu0 0
    %1112 = vmatpush1.bf16.msra.mxu0 0
    %1113 = vmatprep.subr.bf16.mxu0 0
    %1114 = vmatpush1.bf16.msra.mxu0 0
    %1115 = vmatprep.subr.bf16.mxu0 0
    %1116 = vmatpush1.bf16.msra.mxu0 0
    %1117 = vmatprep.subr.bf16.mxu0 0
    %1118 = vmatpush1.bf16.msra.mxu0 0
    %1119 = vmatprep.subr.bf16.mxu0 0
    %1120 = vmatpush1.bf16.msra.mxu0 0
    %1121 = vmatprep.subr.bf16.mxu0 0
    %1122 = vmatpush1.bf16.msra.mxu0 0
    %1123 = vmatprep.subr.bf16.mxu0 0
    %1124 = vmatpush1.bf16.msra.mxu0 0
    %1125 = vmatprep.mubr.bf16.mxu0 0
    %1126 = vmatmul.mubr.bf16.gmra.mrb[0].mxu0 %v1092
    %v1127 = vpop.f32.mrb[0].mxu0
    %v1128 = vadd.f32 0.0, %v1127
    %v1129 = vpop.f32.mrb[0].mxu0
    %v1130 = vadd.f32 0.0, %v1129
    %v1131 = vpop.f32.mrb[0].mxu0
    %v1132 = vpop.f32.mrb[0].mxu0
    %1133 = vdwg.mxu0
    %1134 = vmatprep.subr.bf16.mxu0 %v433
    %1135 = vmatpush1.bf16.msra.mxu0 %v432
    %1136 = vmatprep.subr.bf16.mxu0 %v437
    %1137 = vmatpush1.bf16.msra.mxu0 %v436
    %1138 = vmatprep.subr.bf16.mxu0 %v441
    %1139 = vmatpush1.bf16.msra.mxu0 %v440
    %1140 = vmatprep.subr.bf16.mxu0 %v445
    %1141 = vmatpush1.bf16.msra.mxu0 %v444
    %1142 = vmatprep.subr.bf16.mxu0 %v449
    %1143 = vmatpush1.bf16.msra.mxu0 %v448
    %1144 = vmatprep.subr.bf16.mxu0 %v453
    %1145 = vmatpush1.bf16.msra.mxu0 %v452
    %1146 = vmatprep.subr.bf16.mxu0 %v457
    %1147 = vmatpush1.bf16.msra.mxu0 %v456
    %1148 = vmatprep.subr.bf16.mxu0 %v461
    %1149 = vmatpush1.bf16.msra.mxu0 %v460
    %1150 = vmatprep.subr.bf16.mxu0 0
    %1151 = vmatpush1.bf16.msra.mxu0 0
    %1152 = vmatprep.subr.bf16.mxu0 0
    %1153 = vmatpush1.bf16.msra.mxu0 0
    %1154 = vmatprep.subr.bf16.mxu0 0
    %1155 = vmatpush1.bf16.msra.mxu0 0
    %1156 = vmatprep.subr.bf16.mxu0 0
    %1157 = vmatpush1.bf16.msra.mxu0 0
    %1158 = vmatprep.subr.bf16.mxu0 0
    %1159 = vmatpush1.bf16.msra.mxu0 0
    %1160 = vmatprep.subr.bf16.mxu0 0
    %1161 = vmatpush1.bf16.msra.mxu0 0
    %1162 = vmatprep.subr.bf16.mxu0 0
    %1163 = vmatpush1.bf16.msra.mxu0 0
    %1164 = vmatprep.subr.bf16.mxu0 0
    %1165 = vmatpush1.bf16.msra.mxu0 0
    %1166 = vmatprep.mubr.bf16.mxu0 0
    %1167 = vmatmul.mubr.bf16.gmra.mrb[0].mxu0 %v1092
    %v1168 = vpop.f32.mrb[0].mxu0
    %v1169 = vadd.f32 0.0, %v1168
    %v1170 = vpop.f32.mrb[0].mxu0
    %v1171 = vadd.f32 0.0, %v1170
    %v1172 = vpop.f32.mrb[0].mxu0
    %v1173 = vpop.f32.mrb[0].mxu0
    %1174 = vdwg.mxu0
    %v1179 = vrot.slane %v294, 4
    %v1180 = vrot.slane %v295, 4
    %v1181 = vrot.slane %v296, 4
    %v1182 = vrot.slane %v297, 4
    %v1187 = vunpack.c.l.bf16 %v1179
    %v1188 = vunpack.c.l.bf16 %v1180
    %v1189 = vunpack.c.l.bf16 %v1181
    %v1190 = vunpack.c.l.bf16 %v1182
    %v1191 = vadd.f32 %v1187, %v1128
    %v1192 = vadd.f32 %v1188, %v1130
    %v1193 = vadd.f32 %v1189, %v1169
    %v1194 = vadd.f32 %v1190, %v1171
    %v1195 = vxor.u32 %v1191, 2147483648
    %v1196 = vxor.u32 %v1192, 2147483648
    %v1197 = vxor.u32 %v1193, 2147483648
    %v1198 = vmul.f32 %v1195, 1.442695
    %v1199 = vpow.pop %v1198
    %v1200 = vmul.f32 %v1196, 1.442695
    %v1201 = vpow.pop %v1200
    %v1202 = vmul.f32 %v1197, 1.442695
    %v1203 = vpow.pop %v1202
    %v1204 = vadd.f32 %v1199, 1.0
    %v1205 = vadd.f32 %v1201, 1.0
    %v1206 = vadd.f32 %v1203, 1.0
    %v1207 = vrcp.pop %v1204
    %v1208 = vmul.f32 1.0, %v1207
    %v1209 = vrcp.pop %v1205
    %v1210 = vmul.f32 1.0, %v1209
    %v1211 = vrcp.pop %v1206
    %v1212 = vmul.f32 1.0, %v1211
    %v1213 = vtanh.pop %v1194
    %v1214 = vmul.f32 %v1210, %v1089
    %v1215 = vmul.f32 %v1208, %v1213
    %v1216 = vadd.f32 %v1214, %v1215
    %v1217 = vtanh.pop %v1216
    %v1218 = vmul.f32 %v1212, %v1217
    %v1219 = vpack.c.bf16 %v1218, %v1218
    %1220 = vmatprep.subr.bf16.mxu0 %v431
    %1221 = vmatpush1.bf16.msra.mxu0 %v430
    %1222 = vmatprep.subr.bf16.mxu0 %v435
    %1223 = vmatpush1.bf16.msra.mxu0 %v434
    %1224 = vmatprep.subr.bf16.mxu0 %v439
    %1225 = vmatpush1.bf16.msra.mxu0 %v438
    %1226 = vmatprep.subr.bf16.mxu0 %v443
    %1227 = vmatpush1.bf16.msra.mxu0 %v442
    %1228 = vmatprep.subr.bf16.mxu0 %v447
    %1229 = vmatpush1.bf16.msra.mxu0 %v446
    %1230 = vmatprep.subr.bf16.mxu0 %v451
    %1231 = vmatpush1.bf16.msra.mxu0 %v450
    %1232 = vmatprep.subr.bf16.mxu0 %v455
    %1233 = vmatpush1.bf16.msra.mxu0 %v454
    %1234 = vmatprep.subr.bf16.mxu0 %v459
    %1235 = vmatpush1.bf16.msra.mxu0 %v458
    %1236 = vmatprep.subr.bf16.mxu0 0
    %1237 = vmatpush1.bf16.msra.mxu0 0
    %1238 = vmatprep.subr.bf16.mxu0 0
    %1239 = vmatpush1.bf16.msra.mxu0 0
    %1240 = vmatprep.subr.bf16.mxu0 0
    %1241 = vmatpush1.bf16.msra.mxu0 0
    %1242 = vmatprep.subr.bf16.mxu0 0
    %1243 = vmatpush1.bf16.msra.mxu0 0
    %1244 = vmatprep.subr.bf16.mxu0 0
    %1245 = vmatpush1.bf16.msra.mxu0 0
    %1246 = vmatprep.subr.bf16.mxu0 0
    %1247 = vmatpush1.bf16.msra.mxu0 0
    %1248 = vmatprep.subr.bf16.mxu0 0
    %1249 = vmatpush1.bf16.msra.mxu0 0
    %1250 = vmatprep.subr.bf16.mxu0 0
    %1251 = vmatpush1.bf16.msra.mxu0 0
    %1252 = vmatprep.mubr.bf16.mxu0 0
    %1253 = vmatmul.mubr.bf16.gmra.mrb[0].mxu0 %v1219
    %v1254 = vpop.f32.mrb[0].mxu0
    %v1255 = vadd.f32 0.0, %v1254
    %v1256 = vpop.f32.mrb[0].mxu0
    %v1257 = vadd.f32 0.0, %v1256
    %v1258 = vpop.f32.mrb[0].mxu0
    %v1259 = vpop.f32.mrb[0].mxu0
    %1260 = vdwg.mxu0
    %1261 = vmatprep.subr.bf16.mxu0 %v433
    %1262 = vmatpush1.bf16.msra.mxu0 %v432
    %1263 = vmatprep.subr.bf16.mxu0 %v437
    %1264 = vmatpush1.bf16.msra.mxu0 %v436
    %1265 = vmatprep.subr.bf16.mxu0 %v441
    %1266 = vmatpush1.bf16.msra.mxu0 %v440
    %1267 = vmatprep.subr.bf16.mxu0 %v445
    %1268 = vmatpush1.bf16.msra.mxu0 %v444
    %1269 = vmatprep.subr.bf16.mxu0 %v449
    %1270 = vmatpush1.bf16.msra.mxu0 %v448
    %1271 = vmatprep.subr.bf16.mxu0 %v453
    %1272 = vmatpush1.bf16.msra.mxu0 %v452
    %1273 = vmatprep.subr.bf16.mxu0 %v457
    %1274 = vmatpush1.bf16.msra.mxu0 %v456
    %1275 = vmatprep.subr.bf16.mxu0 %v461
    %1276 = vmatpush1.bf16.msra.mxu0 %v460
    %1277 = vmatprep.subr.bf16.mxu0 0
    %1278 = vmatpush1.bf16.msra.mxu0 0
    %1279 = vmatprep.subr.bf16.mxu0 0
    %1280 = vmatpush1.bf16.msra.mxu0 0
    %1281 = vmatprep.subr.bf16.mxu0 0
    %1282 = vmatpush1.bf16.msra.mxu0 0
    %1283 = vmatprep.subr.bf16.mxu0 0
    %1284 = vmatpush1.bf16.msra.mxu0 0
    %1285 = vmatprep.subr.bf16.mxu0 0
    %1286 = vmatpush1.bf16.msra.mxu0 0
    %1287 = vmatprep.subr.bf16.mxu0 0
    %1288 = vmatpush1.bf16.msra.mxu0 0
    %1289 = vmatprep.subr.bf16.mxu0 0
    %1290 = vmatpush1.bf16.msra.mxu0 0
    %1291 = vmatprep.subr.bf16.mxu0 0
    %1292 = vmatpush1.bf16.msra.mxu0 0
    %1293 = vmatprep.mubr.bf16.mxu0 0
    %1294 = vmatmul.mubr.bf16.gmra.mrb[0].mxu0 %v1219
    %v1295 = vpop.f32.mrb[0].mxu0
    %v1296 = vadd.f32 0.0, %v1295
    %v1297 = vpop.f32.mrb[0].mxu0
    %v1298 = vadd.f32 0.0, %v1297
    %v1299 = vpop.f32.mrb[0].mxu0
    %v1300 = vpop.f32.mrb[0].mxu0
    %1301 = vdwg.mxu0
    %v1302 = vunpack.c.l.bf16 %v298
    %v1303 = vunpack.c.l.bf16 %v299
    %v1304 = vunpack.c.l.bf16 %v300
    %v1305 = vunpack.c.l.bf16 %v301
    %v1306 = vadd.f32 %v1302, %v1255
    %v1307 = vadd.f32 %v1303, %v1257
    %v1308 = vadd.f32 %v1304, %v1296
    %v1309 = vadd.f32 %v1305, %v1298
    %v1310 = vxor.u32 %v1306, 2147483648
    %v1311 = vxor.u32 %v1307, 2147483648
    %v1312 = vxor.u32 %v1308, 2147483648
    %v1313 = vmul.f32 %v1310, 1.442695
    %v1314 = vpow.pop %v1313
    %v1315 = vmul.f32 %v1311, 1.442695
    %v1316 = vpow.pop %v1315
    %v1317 = vmul.f32 %v1312, 1.442695
    %v1318 = vpow.pop %v1317
    %v1319 = vadd.f32 %v1314, 1.0
    %v1320 = vadd.f32 %v1316, 1.0
    %v1321 = vadd.f32 %v1318, 1.0
    %v1322 = vrcp.pop %v1319
    %v1323 = vmul.f32 1.0, %v1322
    %v1324 = vrcp.pop %v1320
    %v1325 = vmul.f32 1.0, %v1324
    %v1326 = vrcp.pop %v1321
    %v1327 = vmul.f32 1.0, %v1326
    %v1328 = vtanh.pop %v1309
    %v1329 = vmul.f32 %v1325, %v1216
    %v1330 = vmul.f32 %v1323, %v1328
    %v1331 = vadd.f32 %v1329, %v1330
    %v1332 = vtanh.pop %v1331
    %v1333 = vmul.f32 %v1327, %v1332
    %v1334 = vpack.c.bf16 %v1333, %v1333
    %1335 = vmatprep.subr.bf16.mxu0 %v431
    %1336 = vmatpush1.bf16.msra.mxu0 %v430
    %1337 = vmatprep.subr.bf16.mxu0 %v435
    %1338 = vmatpush1.bf16.msra.mxu0 %v434
    %1339 = vmatprep.subr.bf16.mxu0 %v439
    %1340 = vmatpush1.bf16.msra.mxu0 %v438
    %1341 = vmatprep.subr.bf16.mxu0 %v443
    %1342 = vmatpush1.bf16.msra.mxu0 %v442
    %1343 = vmatprep.subr.bf16.mxu0 %v447
    %1344 = vmatpush1.bf16.msra.mxu0 %v446
    %1345 = vmatprep.subr.bf16.mxu0 %v451
    %1346 = vmatpush1.bf16.msra.mxu0 %v450
    %1347 = vmatprep.subr.bf16.mxu0 %v455
    %1348 = vmatpush1.bf16.msra.mxu0 %v454
    %1349 = vmatprep.subr.bf16.mxu0 %v459
    %1350 = vmatpush1.bf16.msra.mxu0 %v458
    %1351 = vmatprep.subr.bf16.mxu0 0
    %1352 = vmatpush1.bf16.msra.mxu0 0
    %1353 = vmatprep.subr.bf16.mxu0 0
    %1354 = vmatpush1.bf16.msra.mxu0 0
    %1355 = vmatprep.subr.bf16.mxu0 0
    %1356 = vmatpush1.bf16.msra.mxu0 0
    %1357 = vmatprep.subr.bf16.mxu0 0
    %1358 = vmatpush1.bf16.msra.mxu0 0
    %1359 = vmatprep.subr.bf16.mxu0 0
    %1360 = vmatpush1.bf16.msra.mxu0 0
    %1361 = vmatprep.subr.bf16.mxu0 0
    %1362 = vmatpush1.bf16.msra.mxu0 0
    %1363 = vmatprep.subr.bf16.mxu0 0
    %1364 = vmatpush1.bf16.msra.mxu0 0
    %1365 = vmatprep.subr.bf16.mxu0 0
    %1366 = vmatpush1.bf16.msra.mxu0 0
    %1367 = vmatprep.mubr.bf16.mxu0 0
    %1368 = vmatmul.mubr.bf16.gmra.mrb[0].mxu0 %v1334
    %v1369 = vpop.f32.mrb[0].mxu0
    %v1370 = vadd.f32 0.0, %v1369
    %v1371 = vpop.f32.mrb[0].mxu0
    %v1372 = vadd.f32 0.0, %v1371
    %v1373 = vpop.f32.mrb[0].mxu0
    %v1374 = vpop.f32.mrb[0].mxu0
    %1375 = vdwg.mxu0
    %1376 = vmatprep.subr.bf16.mxu0 %v433
    %1377 = vmatpush1.bf16.msra.mxu0 %v432
    %1378 = vmatprep.subr.bf16.mxu0 %v437
    %1379 = vmatpush1.bf16.msra.mxu0 %v436
    %1380 = vmatprep.subr.bf16.mxu0 %v441
    %1381 = vmatpush1.bf16.msra.mxu0 %v440
    %1382 = vmatprep.subr.bf16.mxu0 %v445
    %1383 = vmatpush1.bf16.msra.mxu0 %v444
    %1384 = vmatprep.subr.bf16.mxu0 %v449
    %1385 = vmatpush1.bf16.msra.mxu0 %v448
    %1386 = vmatprep.subr.bf16.mxu0 %v453
    %1387 = vmatpush1.bf16.msra.mxu0 %v452
    %1388 = vmatprep.subr.bf16.mxu0 %v457
    %1389 = vmatpush1.bf16.msra.mxu0 %v456
    %1390 = vmatprep.subr.bf16.mxu0 %v461
    %1391 = vmatpush1.bf16.msra.mxu0 %v460
    %1392 = vmatprep.subr.bf16.mxu0 0
    %1393 = vmatpush1.bf16.msra.mxu0 0
    %1394 = vmatprep.subr.bf16.mxu0 0
    %1395 = vmatpush1.bf16.msra.mxu0 0
    %1396 = vmatprep.subr.bf16.mxu0 0
    %1397 = vmatpush1.bf16.msra.mxu0 0
    %1398 = vmatprep.subr.bf16.mxu0 0
    %1399 = vmatpush1.bf16.msra.mxu0 0
    %1400 = vmatprep.subr.bf16.mxu0 0
    %1401 = vmatpush1.bf16.msra.mxu0 0
    %1402 = vmatprep.subr.bf16.mxu0 0
    %1403 = vmatpush1.bf16.msra.mxu0 0
    %1404 = vmatprep.subr.bf16.mxu0 0
    %1405 = vmatpush1.bf16.msra.mxu0 0
    %1406 = vmatprep.subr.bf16.mxu0 0
    %1407 = vmatpush1.bf16.msra.mxu0 0
    %1408 = vmatprep.mubr.bf16.mxu0 0
    %1409 = vmatmul.mubr.bf16.gmra.mrb[0].mxu0 %v1334
    %v1410 = vpop.f32.mrb[0].mxu0
    %v1411 = vpop.f32.mrb[0].mxu0
    %v1412 = vadd.f32 0.0, %v1411
    %v1413 = vpop.f32.mrb[0].mxu0
    %v1414 = vpop.f32.mrb[0].mxu0
    %1415 = vdwg.mxu0
    %v1419 = vrot.slane %v298, 4
    %v1420 = vrot.slane %v299, 4
    %v1421 = vrot.slane %v301, 4
    %v1425 = vunpack.c.l.bf16 %v1419
    %v1426 = vunpack.c.l.bf16 %v1420
    %v1427 = vunpack.c.l.bf16 %v1421
    %v1428 = vadd.f32 %v1425, %v1370
    %v1429 = vadd.f32 %v1426, %v1372
    %v1430 = vadd.f32 %v1427, %v1412
    %v1431 = vxor.u32 %v1428, 2147483648
    %v1432 = vxor.u32 %v1429, 2147483648
    %v1433 = vmul.f32 %v1431, 1.442695
    %v1434 = vpow.pop %v1433
    %v1435 = vmul.f32 %v1432, 1.442695
    %v1436 = vpow.pop %v1435
    %v1437 = vadd.f32 %v1434, 1.0
    %v1438 = vadd.f32 %v1436, 1.0
    %v1439 = vrcp.pop %v1437
    %v1440 = vmul.f32 1.0, %v1439
    %v1441 = vrcp.pop %v1438
    %v1442 = vmul.f32 1.0, %v1441
    %v1443 = vtanh.pop %v1430
    %v1444 = vmul.f32 %v1442, %v1331
    %v1445 = vmul.f32 %v1440, %v1443
    %v1446 = vadd.f32 %v1444, %v1445
    %v1447 = vpack.c.bf16 %v1446, %v1446
    %v1448 = vld [vmem:[#allocation5] sm:$0xf]
    %v1449 = vld [vmem:[#allocation5 + $0x4] sm:$0xf]
    %v1450 = vld [vmem:[#allocation5 + $0x8] sm:$0xf]
    %v1451 = vld [vmem:[#allocation5 + $0xc] sm:$0xf]
    %v1452 = vld [vmem:[#allocation5 + $0x10] sm:$0xf]
    %v1453 = vld [vmem:[#allocation5 + $0x14] sm:$0xf]
    %v1454 = vld [vmem:[#allocation5 + $0x18] sm:$0xf]
    %v1455 = vld [vmem:[#allocation5 + $0x1c] sm:$0xf]
    %v1456 = vld [vmem:[#allocation5 + $0x20] sm:$0xf]
    %v1457 = vld [vmem:[#allocation5 + $0x24] sm:$0xf]
    %v1458 = vld [vmem:[#allocation5 + $0x28] sm:$0xf]
    %v1459 = vld [vmem:[#allocation5 + $0x2c] sm:$0xf]
    %v1460 = vld [vmem:[#allocation5 + $0x30] sm:$0xf]
    %v1461 = vld [vmem:[#allocation5 + $0x34] sm:$0xf]
    %v1462 = vld [vmem:[#allocation5 + $0x38] sm:$0xf]
    %v1463 = vld [vmem:[#allocation5 + $0x3c] sm:$0xf]
    %v1464 = vld [vmem:[%s5] sm:$0x1]
    %v1466 = vlaneseq
    %v1467 = vshrl.u32 %v1466, 7
    %v1468 = vsub.s32 0, %v1467
    %v1469 = vrot.slane %v1464, %v1468
    %v1487 = vunpack.c.l.b16 %v1448
    %v1488 = vunpack.c.l.b16 %v1449
    %v1489 = vunpack.c.l.b16 %v1450
    %v1490 = vunpack.c.l.b16 %v1451
    %v1491 = vunpack.c.l.b16 %v1452
    %v1492 = vunpack.c.l.b16 %v1453
    %v1493 = vunpack.c.l.b16 %v1454
    %v1494 = vunpack.c.l.b16 %v1455
    %v1495 = vunpack.c.l.b16 %v1456
    %v1496 = vunpack.c.l.b16 %v1457
    %v1497 = vunpack.c.l.b16 %v1458
    %v1498 = vunpack.c.l.b16 %v1459
    %v1499 = vunpack.c.l.b16 %v1460
    %v1500 = vunpack.c.l.b16 %v1461
    %v1501 = vunpack.c.l.b16 %v1462
    %v1502 = vunpack.c.l.b16 %v1463
    %v1503 = vpack.c.b16 %v1488, %v1487
    %v1504 = vpack.c.b16 %v1490, %v1489
    %v1505 = vpack.c.b16 %v1492, %v1491
    %v1506 = vpack.c.b16 %v1494, %v1493
    %v1507 = vpack.c.b16 %v1496, %v1495
    %v1508 = vpack.c.b16 %v1498, %v1497
    %v1509 = vpack.c.b16 %v1500, %v1499
    %v1510 = vpack.c.b16 %v1502, %v1501
    %1519 = vmatprep.subr.bf16.mxu0 0
    %1520 = vmatpush1.bf16.msra.mxu0 %v1503
    %1521 = vmatprep.subr.bf16.mxu0 0
    %1522 = vmatpush1.bf16.msra.mxu0 %v1504
    %1523 = vmatprep.subr.bf16.mxu0 0
    %1524 = vmatpush1.bf16.msra.mxu0 %v1505
    %1525 = vmatprep.subr.bf16.mxu0 0
    %1526 = vmatpush1.bf16.msra.mxu0 %v1506
    %1527 = vmatprep.subr.bf16.mxu0 0
    %1528 = vmatpush1.bf16.msra.mxu0 %v1507
    %1529 = vmatprep.subr.bf16.mxu0 0
    %1530 = vmatpush1.bf16.msra.mxu0 %v1508
    %1531 = vmatprep.subr.bf16.mxu0 0
    %1532 = vmatpush1.bf16.msra.mxu0 %v1509
    %1533 = vmatprep.subr.bf16.mxu0 0
    %1534 = vmatpush1.bf16.msra.mxu0 %v1510
    %1535 = vmatprep.subr.bf16.mxu0 0
    %1536 = vmatpush1.bf16.msra.mxu0 0
    %1537 = vmatprep.subr.bf16.mxu0 0
    %1538 = vmatpush1.bf16.msra.mxu0 0
    %1539 = vmatprep.subr.bf16.mxu0 0
    %1540 = vmatpush1.bf16.msra.mxu0 0
    %1541 = vmatprep.subr.bf16.mxu0 0
    %1542 = vmatpush1.bf16.msra.mxu0 0
    %1543 = vmatprep.subr.bf16.mxu0 0
    %1544 = vmatpush1.bf16.msra.mxu0 0
    %1545 = vmatprep.subr.bf16.mxu0 0
    %1546 = vmatpush1.bf16.msra.mxu0 0
    %1547 = vmatprep.subr.bf16.mxu0 0
    %1548 = vmatpush1.bf16.msra.mxu0 0
    %1549 = vmatprep.subr.bf16.mxu0 0
    %1550 = vmatpush1.bf16.msra.mxu0 0
    %1551 = vmatprep.mubr.bf16.mxu0 0
    %1552 = vmatmul.mubr.bf16.gmra.mrb[0].mxu0 %v1447
    %v1553 = vpop.f32.mrb[0].mxu0
    %v1554 = vadd.f32 %v1469, %v1553
    %v1555 = vpop.f32.mrb[0].mxu0
    %v1556 = vpop.f32.mrb[0].mxu0
    %v1557 = vpop.f32.mrb[0].mxu0
    %1558 = vdwg.mxu0
    %1559 = vmax.xlane.f32.xlu0 %v1554
    %v1560 = vpop.xlane.xlu0 %1559
    %v1561 = vsub.f32 %v1554, %v1560
    %v1562 = vmul.f32 %v1561, 1.442695
    %v1563 = vpow.pop %v1562
    %1564 = vadd.xlane.f32.xlu0 %v1563
    %v1565 = vpop.xlane.xlu0 %1564
    %v1566 = vrcp.pop %v1565
    %v1567 = vmul.f32 %v1563, %v1566
    %1568 = vst [vmem:[#allocation7] sm:$0xff] %v1567
    // Predicated region
    $region34: #{tpu_custom_call.1} parent=1 // pred_check
      _
    $region35: #{tpu_custom_call.1} parent=1 // pred_check_branch
      %1570 = sbr.rel (0) target = $region37
    $region36: #{tpu_custom_call.1} parent=1 // pred_region
      %s1572 = ssub.s32 128, 128
      %1573 = vsyncadd [#allocation4], %s1572
      %s1575 = sshll.u32 [#allocation7], 4
      %s1576 = int_to_ptr.vmem [resolvable:$true] %s1575
      %1578 = dma.vmem_to_hbm [thread:$0]  %s1576, 128, %s6, [#allocation4]
    $region37: #{tpu_custom_call.1} parent=1 // pred_fallthru
      _
    // Predicated region
    $region38: #{tpu_custom_call.1} parent=1 // pred_check
      _
    $region39: #{tpu_custom_call.1} parent=1 // pred_check_branch
      %1580 = sbr.rel (0) target = $region41
    $region40: #{tpu_custom_call.1} parent=1 // pred_region
      %1581 = dma.done [#allocation4], 128
    $region41: #{tpu_custom_call.1} parent=1 // pred_fallthru
      _
    %1582 = vsyncpa [#allocation3], 1
    %1583 = vsyncpa [#allocation6], 1
    %1584 = vsyncpa [#allocation4], 1

</llo_original>
